<compile_context>
chip_gen: v5e
topology: v5e:2x2
jax: 0.10.0
libtpu: 0.0.40
codegen_flags: <defaults>
</compile_context>

<pallas_src>
import functools
import math

import jax
import jax.numpy as jnp
from jax.experimental import pallas as pl
from jax.experimental.pallas import tpu as pltpu


C_PAD = 128       # lane-dense padded channel width
BN_EPS = 1e-5
LEAKY_SLOPE = 0.01


# ----------------------------- Pallas kernels --------------------------------

def gcn_agg_kernel(a_ref, z_ref, h_ref, psum_ref, acc_ref, *, tile_k):
    """One (row-tile, reduction-tile) step of H = A_hat @ Z (both bf16)."""
    k = pl.program_id(1)

    @pl.when(k == 0)
    def _init():
        acc_ref[...] = jnp.zeros_like(acc_ref)

    # Z is VMEM-resident for the whole grid; slice the k-th reduction block.
    start = pl.multiple_of(k * tile_k, tile_k)
    zk = z_ref[pl.ds(start, tile_k), :]                      # bf16 [tile_k, C]
    # bf16 x bf16 MXU matmul with f32 accumulation (no f32 upcast of A).
    acc_ref[...] += jnp.dot(a_ref[...], zk, preferred_element_type=jnp.float32)

    @pl.when(k == pl.num_programs(1) - 1)
    def _finalize():
        acc = acc_ref[...]
        # BatchNorm partial statistics from the f32 accumulator (pre-cast).
        psum_ref[0, 0:1, :] = jnp.sum(acc, axis=0, keepdims=True)
        psum_ref[0, 1:2, :] = jnp.sum(acc * acc, axis=0, keepdims=True)
        # H written back as bf16 (halves HBM writeback + phase-2 read).
        h_ref[...] = acc.astype(h_ref.dtype)


def bn_act_linear_kernel(h_ref, scale_ref, shift_ref, wl_ref, bl_ref, o_ref):
    """Fused BatchNorm affine (pre-folded scale/shift) -> LeakyReLU -> Linear."""
    # Element-wise work stays in f32 (v5e has no bf16 VPU path).
    h = h_ref[...].astype(jnp.float32) * scale_ref[...] + shift_ref[...]
    h = jnp.where(h > 0, h, LEAKY_SLOPE * h)
    o_ref[...] = (
        jnp.dot(h.astype(jnp.bfloat16), wl_ref[...],
                preferred_element_type=jnp.float32) + bl_ref[...]
    ).astype(o_ref.dtype)


# ------------------------------- Wrapper --------------------------------------

def tgcn_forward(params, x, edge_index, edge_weight, time_diff, is_weekend):
    """Forward pass matching TGCNLayer.forward (eval-mode dropout)."""
    n, in_c = x.shape
    out_c = params["gcn_weight"].shape[0]

    # ---- glue: scalar time encoding (sin/cos of per-feature frequencies) ----
    te = jnp.where(
        is_weekend,
        jnp.sin(time_diff * params["workday_freq"] * math.pi),
        jnp.cos(time_diff * params["weekday_freq"] * math.pi),
    ).astype(jnp.float32)                                             # [F]

    # ---- tiling: pad nodes to a multiple of 512; keep >=2 row tiles (v7x) ----
    n_pad = pl.cdiv(n, 512) * 512
    tile_k = 512                                   # reduction tile (>=1 KiB bf16 rows)
    tile_m = 512 if n_pad >= 1024 else n_pad // 2  # >=2 row tiles for megacore
    n_row_tiles = n_pad // tile_m
    n_red_tiles = n_pad // tile_k

    # ---- glue: normalized adjacency with self loops, scattered straight into
    #      the padded bf16 buffer (no extra full-N^2 pad/astype passes) ----
    src = jnp.concatenate([edge_index[0], jnp.arange(n, dtype=edge_index.dtype)])
    dst = jnp.concatenate([edge_index[1], jnp.arange(n, dtype=edge_index.dtype)])
    w = jnp.concatenate([edge_weight.astype(jnp.float32),
                         jnp.ones((n,), jnp.float32)])
    deg = jnp.zeros((n,), jnp.float32).at[dst].add(w)
    dinv = jnp.where(deg > 0, jax.lax.rsqrt(deg), 0.0)
    norm = dinv[src] * w * dinv[dst]
    a_hat = jnp.zeros((n_pad, n_pad), jnp.bfloat16).at[dst, src].add(
        norm.astype(jnp.bfloat16))

    # ---- glue: Z = X @ Wg_x + r computed ONCE (tiny K=in_c matmul), bf16 ----
    wg_t = params["gcn_weight"].T.astype(jnp.float32)                 # [in+F, C]
    wgx = jnp.zeros((in_c, C_PAD), jnp.float32).at[:, :out_c].set(wg_t[:in_c])
    r = jnp.zeros((1, C_PAD), jnp.float32).at[0, :out_c].set(te @ wg_t[in_c:])
    x_p = jnp.pad(x.astype(jnp.float32), ((0, n_pad - n), (0, 0)))
    z = (x_p @ wgx + r).astype(jnp.bfloat16)                          # [n_pad, C]

    gamma = jnp.zeros((C_PAD,), jnp.float32).at[:out_c].set(params["bn_gamma"])
    beta = jnp.zeros((C_PAD,), jnp.float32).at[:out_c].set(params["bn_beta"])
    wl = jnp.zeros((C_PAD, C_PAD), jnp.bfloat16).at[:out_c, :out_c].set(
        params["lin_weight"].T.astype(jnp.bfloat16))
    bl = jnp.zeros((1, C_PAD), jnp.float32).at[0, :out_c].set(params["lin_bias"])

    # ---- phase 1: H = A_hat @ Z, plus partial BN statistics ----
    flops1 = 2 * n_pad * n_pad * C_PAD
    bytes1 = (n_pad * n_pad * 2                       # A_hat (bf16)
              + n_pad * C_PAD * 2                     # Z (bf16, read once)
              + n_pad * C_PAD * 2                     # H writeback (bf16)
              + n_row_tiles * 2 * C_PAD * 4)          # stats
    h, psum = pl.pallas_call(
        functools.partial(gcn_agg_kernel, tile_k=tile_k),
        out_shape=(
            jax.ShapeDtypeStruct((n_pad, C_PAD), jnp.bfloat16),
            jax.ShapeDtypeStruct((n_row_tiles, 2, C_PAD), jnp.float32),
        ),
        grid_spec=pltpu.PrefetchScalarGridSpec(
            num_scalar_prefetch=0,
            grid=(n_row_tiles, n_red_tiles),
            in_specs=[
                pl.BlockSpec((tile_m, tile_k), lambda i, k: (i, k)),   # A_hat
                pl.BlockSpec((n_pad, C_PAD), lambda i, k: (0, 0)),     # Z (resident)
            ],
            out_specs=(
                pl.BlockSpec((tile_m, C_PAD), lambda i, k: (i, 0)),    # H (bf16)
                pl.BlockSpec((1, 2, C_PAD), lambda i, k: (i, 0, 0)),   # stats
            ),
            scratch_shapes=[pltpu.VMEM((tile_m, C_PAD), jnp.float32)],
        ),
        compiler_params=pltpu.CompilerParams(
            dimension_semantics=("parallel", "arbitrary"),
            vmem_limit_bytes=32 * 1024 * 1024,
        ),
        cost_estimate=pl.CostEstimate(
            flops=flops1, transcendentals=0, bytes_accessed=bytes1),
    )(a_hat, z)

    # ---- glue: reduce partial sums -> folded BN affine (scale, shift) ----
    tot = jnp.sum(psum, axis=0)                 # [2, C_PAD]; pad rows are zero
    mean = tot[0] / n                           # divide by the REAL node count
    var = tot[1] / n - mean * mean              # biased variance (BatchNorm1d)
    inv_std = jax.lax.rsqrt(var + BN_EPS)
    scale = (gamma * inv_std)[None, :]                      # [1, C_PAD]
    shift = (beta - gamma * inv_std * mean)[None, :]        # [1, C_PAD]

    # ---- phase 2: normalize -> LeakyReLU -> Linear (dropout = identity) ----
    flops2 = 2 * n_pad * C_PAD * C_PAD + 4 * n_pad * C_PAD
    bytes2 = n_pad * C_PAD * (2 + 4) + C_PAD * C_PAD * 2
    out_pad = pl.pallas_call(
        bn_act_linear_kernel,
        out_shape=jax.ShapeDtypeStruct((n_pad, C_PAD), jnp.float32),
        grid_spec=pltpu.PrefetchScalarGridSpec(
            num_scalar_prefetch=0,
            grid=(n_row_tiles,),
            in_specs=[
                pl.BlockSpec((tile_m, C_PAD), lambda i: (i, 0)),       # H (bf16)
                pl.BlockSpec((1, C_PAD), lambda i: (0, 0)),            # scale
                pl.BlockSpec((1, C_PAD), lambda i: (0, 0)),            # shift
                pl.BlockSpec((C_PAD, C_PAD), lambda i: (0, 0)),        # Wl (bf16)
                pl.BlockSpec((1, C_PAD), lambda i: (0, 0)),            # bl
            ],
            out_specs=pl.BlockSpec((tile_m, C_PAD), lambda i: (i, 0)),
        ),
        compiler_params=pltpu.CompilerParams(
            dimension_semantics=("parallel",),
            vmem_limit_bytes=32 * 1024 * 1024,
        ),
        cost_estimate=pl.CostEstimate(
            flops=flops2, transcendentals=0, bytes_accessed=bytes2),
    )(h, scale, shift, wl, bl)

    # Slice away node padding and channel padding.
    return out_pad[:n, :out_c]


# -------------------------- pure-JAX reference --------------------------------

def tgcn_reference(params, x, edge_index, edge_weight, time_diff, is_weekend):
    n = x.shape[0]
    f = params["workday_freq"].shape[0]
    te = jnp.where(
        is_weekend,
        jnp.sin(time_diff * params["workday_freq"] * math.pi),
        jnp.cos(time_diff * params["weekday_freq"] * math.pi),
    )
    x_cat = jnp.concatenate([x, jnp.broadcast_to(te[None, :], (n, f))], axis=1)

    src = jnp.concatenate([edge_index[0], jnp.arange(n, dtype=edge_index.dtype)])
    dst = jnp.concatenate([edge_index[1], jnp.arange(n, dtype=edge_index.dtype)])
    w = jnp.concatenate([edge_weight, jnp.ones((n,), jnp.float32)])
    deg = jnp.zeros((n,), jnp.float32).at[dst].add(w)
    dinv = jnp.where(deg > 0, jax.lax.rsqrt(deg), 0.0)
    norm = dinv[src] * w * dinv[dst]
    a_hat = jnp.zeros((n, n), jnp.float32).at[dst, src].add(norm)

    h = a_hat @ (x_cat @ params["gcn_weight"].T) + params["gcn_bias"]
    mean = jnp.mean(h, axis=0, keepdims=True)
    var = jnp.mean((h - mean) ** 2, axis=0, keepdims=True)
    h = (h - mean) / jnp.sqrt(var + BN_EPS)
    h = h * params["bn_gamma"] + params["bn_beta"]
    h = jnp.where(h > 0, h, LEAKY_SLOPE * h)
    h = h @ params["lin_weight"].T + params["lin_bias"]
    return h


# --------------------------------- main ---------------------------------------

if __name__ == "__main__":
    # Small shapes: N=300 nodes (padded to 512 -> 2 row tiles of 256, 1 reduction
    # tile of 512), in_channels=4, num_time_features=4, out_channels=32 (padded
    # to 128 lanes).
    N, IN_C, NUM_TF, OUT_C = 300, 4, 4, 32

    key = jax.random.PRNGKey(0)
    keys = jax.random.split(key, 8)

    params = {
        "workday_freq": jax.random.normal(keys[0], (NUM_TF,), jnp.float32),
        "weekday_freq": jax.random.normal(keys[1], (NUM_TF,), jnp.float32),
        "gcn_weight": jax.random.normal(keys[2], (OUT_C, IN_C + NUM_TF), jnp.float32)
        * (1.0 / math.sqrt(IN_C + NUM_TF)),
        "gcn_bias": jax.random.normal(keys[3], (OUT_C,), jnp.float32) * 0.1,
        "bn_gamma": jnp.ones((OUT_C,), jnp.float32),
        "bn_beta": jnp.zeros((OUT_C,), jnp.float32),
        "lin_weight": jax.random.normal(keys[4], (OUT_C, OUT_C), jnp.float32)
        * (1.0 / math.sqrt(OUT_C)),
        "lin_bias": jax.random.normal(keys[5], (OUT_C,), jnp.float32) * 0.1,
    }

    # Inputs: node features + a bidirectional ring graph.
    x = jax.random.normal(keys[6], (N, IN_C), jnp.float32)
    idx = jnp.arange(N, dtype=jnp.int32)
    src = jnp.concatenate([idx, (idx + 1) % N])
    dst = jnp.concatenate([(idx + 1) % N, idx])
    edge_index = jnp.stack([src, dst], axis=0)                    # [2, 2N]
    edge_weight = jax.random.uniform(
        keys[7], (2 * N,), jnp.float32, minval=0.5, maxval=1.5)
    time_diff = jnp.float32(0.75)
    is_weekend = jnp.bool_(True)

    out = tgcn_forward(params, x, edge_index, edge_weight, time_diff, is_weekend)
    out = jax.block_until_ready(out)

    ref = tgcn_reference(params, x, edge_index, edge_weight, time_diff, is_weekend)
    assert out.shape == (N, OUT_C)
    # Tolerance accounts for the bf16 adjacency stream, the bf16 H writeback,
    # and the bf16 MXU matmuls (the reference is full f32).
    max_err = float(jnp.max(jnp.abs(out - ref)))
    ref_scale = max(float(jnp.max(jnp.abs(ref))), 1.0)
    assert max_err <= 5e-2 * ref_scale, f"mismatch vs reference: {max_err}"

    print("KERNEL_OK")
</pallas_src>

<mosaic_0001>
module attributes {stable_mosaic.version = 11 : i64} {
  func.func @gcn_agg_kernel(%arg0: i32, %arg1: i32, %arg2: memref<256x512xbf16, #tpu.memory_space<vmem>>, %arg3: memref<512x128xbf16, #tpu.memory_space<vmem>>, %arg4: memref<256x128xbf16, #tpu.memory_space<vmem>>, %arg5: memref<1x2x128xf32, #tpu.memory_space<vmem>>, %arg6: memref<256x128xf32, #tpu.memory_space<vmem>>) attributes {dimension_semantics = [#tpu.dimension_semantics<parallel>, #tpu.dimension_semantics<arbitrary>], iteration_bounds = array<i64: 2, 1>, scalar_prefetch = 0 : i64, scratch_operands = 1 : i64, tpu.core_type = #tpu.core_type<tc>, window_params = [{transform_indices = @transform_0, window_bounds = array<i64: 256, 512>}, {pipeline_mode = #tpu.pipeline_mode<synchronous>, transform_indices = @transform_1, window_bounds = array<i64: 512, 128>}, {transform_indices = @transform_2, window_bounds = array<i64: 256, 128>}, {transform_indices = @transform_3, window_bounds = array<i64: 1, 2, 128>}]} {
    %c0_i32 = arith.constant 0 : i32
    %0 = arith.cmpi eq, %arg1, %c0_i32 : i32
    %1 = arith.extui %0 : i1 to i32
    %c0_i32_0 = arith.constant 0 : i32
    %2 = arith.cmpi ne, %1, %c0_i32_0 : i32
    scf.if %2 {
      %cst_9 = arith.constant 0.000000e+00 : f32
      %15 = vector.broadcast %cst_9 : f32 to vector<256x128xf32>
      %c0_10 = arith.constant 0 : index
      %c0_11 = arith.constant 0 : index
      %16 = vector.load %arg6[%c0_10, %c0_11] : memref<256x128xf32, #tpu.memory_space<vmem>>, vector<256x128xf32>
      tpu.vector_store %arg6[%c0_10, %c0_11], %15 {strides = array<i32>} : memref<256x128xf32, #tpu.memory_space<vmem>>, vector<256x128xf32>,
    } else {
    }
    %c512_i32 = arith.constant 512 : i32
    %3 = arith.muli %arg1, %c512_i32 : i32
    %4 = tpu.assume_multiple %3, 512 : i32
    %5 = arith.index_cast %4 : i32 to index
    %c0 = arith.constant 0 : index
    %6 = vector.load %arg3[%5, %c0] : memref<512x128xbf16, #tpu.memory_space<vmem>>, vector<512x128xbf16>
    %c0_1 = arith.constant 0 : index
    %c0_2 = arith.constant 0 : index
    %7 = vector.load %arg6[%c0_1, %c0_2] : memref<256x128xf32, #tpu.memory_space<vmem>>, vector<256x128xf32>
    %c0_3 = arith.constant 0 : index
    %c0_4 = arith.constant 0 : index
    %8 = vector.load %arg2[%c0_3, %c0_4] : memref<256x512xbf16, #tpu.memory_space<vmem>>, vector<256x512xbf16>
    %cst = arith.constant dense<0.000000e+00> : vector<256x128xf32>
    %9 = tpu.matmul %8, %6, %cst {dimension_numbers = #tpu.dot_dimension_numbers<[1], [0], [0], [1], [0, 0, 1, 1], [], []>} : vector<256x512xbf16>, vector<512x128xbf16>, vector<256x128xf32> -> vector<256x128xf32>
    %10 = arith.addf %7, %9 : vector<256x128xf32>
    %c0_5 = arith.constant 0 : index
    %c0_6 = arith.constant 0 : index
    %11 = vector.load %arg6[%c0_5, %c0_6] : memref<256x128xf32, #tpu.memory_space<vmem>>, vector<256x128xf32>
    tpu.vector_store %arg6[%c0_5, %c0_6], %10 {strides = array<i32>} : memref<256x128xf32, #tpu.memory_space<vmem>>, vector<256x128xf32>,
    %c0_i32_7 = arith.constant 0 : i32
    %12 = arith.cmpi eq, %arg1, %c0_i32_7 : i32
    %13 = arith.extui %12 : i1 to i32
    %c0_i32_8 = arith.constant 0 : i32
    %14 = arith.cmpi ne, %13, %c0_i32_8 : i32
    scf.if %14 {
      %c0_9 = arith.constant 0 : index
      %c0_10 = arith.constant 0 : index
      %15 = vector.load %arg6[%c0_9, %c0_10] : memref<256x128xf32, #tpu.memory_space<vmem>>, vector<256x128xf32>
      %cst_11 = arith.constant dense<0.000000e+00> : vector<128xf32>
      %16 = vector.multi_reduction <add>, %15, %cst_11 [0] : vector<256x128xf32> to vector<128xf32>
      %17 = vector.shape_cast %16 : vector<128xf32> to vector<1x128xf32>
      %c0_12 = arith.constant 0 : index
      %c0_13 = arith.constant 0 : index
      %c0_14 = arith.constant 0 : index
      %18 = vector.load %arg5[%c0_12, %c0_13, %c0_14] : memref<1x2x128xf32, #tpu.memory_space<vmem>>, vector<1x1x128xf32>
      %19 = vector.shape_cast %18 : vector<1x1x128xf32> to vector<1x128xf32>
      %20 = vector.shape_cast %17 : vector<1x128xf32> to vector<1x1x128xf32>
      tpu.vector_store %arg5[%c0_12, %c0_13, %c0_14], %20 {strides = array<i32>} : memref<1x2x128xf32, #tpu.memory_space<vmem>>, vector<1x1x128xf32>,
      %21 = arith.mulf %15, %15 : vector<256x128xf32>
      %cst_15 = arith.constant dense<0.000000e+00> : vector<128xf32>
      %22 = vector.multi_reduction <add>, %21, %cst_15 [0] : vector<256x128xf32> to vector<128xf32>
      %23 = vector.shape_cast %22 : vector<128xf32> to vector<1x128xf32>
      %c0_16 = arith.constant 0 : index
      %c1 = arith.constant 1 : index
      %c0_17 = arith.constant 0 : index
      %24 = vector.load %arg5[%c0_16, %c1, %c0_17] : memref<1x2x128xf32, #tpu.memory_space<vmem>>, vector<1x1x128xf32>
      %25 = vector.shape_cast %24 : vector<1x1x128xf32> to vector<1x128xf32>
      %26 = vector.shape_cast %23 : vector<1x128xf32> to vector<1x1x128xf32>
      tpu.vector_store %arg5[%c0_16, %c1, %c0_17], %26 {strides = array<i32>} : memref<1x2x128xf32, #tpu.memory_space<vmem>>, vector<1x1x128xf32>,
      %27 = arith.truncf %15 : vector<256x128xf32> to vector<256x128xbf16>
      %c0_18 = arith.constant 0 : index
      %c0_19 = arith.constant 0 : index
      %28 = vector.load %arg4[%c0_18, %c0_19] : memref<256x128xbf16, #tpu.memory_space<vmem>>, vector<256x128xbf16>
      tpu.vector_store %arg4[%c0_18, %c0_19], %27 {strides = array<i32>} : memref<256x128xbf16, #tpu.memory_space<vmem>>, vector<256x128xbf16>,
    } else {
    }
    return
  }
  func.func @transform_0(%arg0: i32, %arg1: i32) -> (i32, i32) {
    %c0_i32 = arith.constant 0 : i32
    return %arg0, %arg1 : i32, i32
  }
  func.func @transform_1(%arg0: i32, %arg1: i32) -> (i32, i32) {
    %c0_i32 = arith.constant 0 : i32
    %c0_i32_0 = arith.constant 0 : i32
    %c0_i32_1 = arith.constant 0 : i32
    return %c0_i32, %c0_i32_0 : i32, i32
  }
  func.func @transform_2(%arg0: i32, %arg1: i32) -> (i32, i32) {
    %c0_i32 = arith.constant 0 : i32
    %c0_i32_0 = arith.constant 0 : i32
    return %arg0, %c0_i32 : i32, i32
  }
  func.func @transform_3(%arg0: i32, %arg1: i32) -> (i32, i32, i32) {
    %c0_i32 = arith.constant 0 : i32
    %c0_i32_0 = arith.constant 0 : i32
    %c0_i32_1 = arith.constant 0 : i32
    return %arg0, %c0_i32, %c0_i32_0 : i32, i32, i32
  }
}

</mosaic_0001>

<llo_original>
// kernel: tpu_custom_call.1
$region0: #{tpu_custom_call.1}
  #allocation0 [shape = 'u32[]', space=smem, size = 0x4, offset = 0x4, fixed_abs, tag = 'smem constant byte address 0x4 - core index']
  #allocation1 [shape = 'u32[72,128]{1,0:T(1,128)}', space=vmem, size = 0x9000, scoped, tag = 'internal scratch']
  #allocation2 [shape = 'f32[256,128]{1,0:T(8,128)}', space=vmem, size = 0x20000, scoped, tag = 'scratch operand']
  %s0 = inlined_call_operand.hbm [shape: bf16[512,512], index: 0, kind: input, shape index: {}]
  %s1 = inlined_call_operand.hbm [shape: bf16[512,128], index: 1, kind: input, shape index: {}]
  %s2 = inlined_call_operand.hbm [shape: bf16[512,128], index: 2, kind: output, shape index: {0}]
  %s3 = inlined_call_operand.hbm [shape: f32[2,2,128], index: 3, kind: output, shape index: {1}]
  %4 = xla_tuple %s2, %s3
  %s5 = sld [smem:[#allocation0]]
  $region65: #{tpu_custom_call.1} parent=0
    _
  %s7 = ssub.s32 1, %s5
  %s8 = scalar_select 0, %s7, %s5
  $region1: #{tpu_custom_call.1} parent=0
    #allocation3 [shape = 'u8[524288]{0}', space=vmem, size = 0x80000, scoped, tag = 'input window, operand 0']
    #allocation4 [shape = 's32[2]{0}', space=sflag, size = 0x8, scoped, tag = 'scoped memory for tpu_custom_call.1']
    #allocation5 [shape = 's32[2]{0}', space=sflag, size = 0x8, scoped, tag = 'scoped memory for tpu_custom_call.1']
    #allocation6 [shape = 'u8[131072]{0}', space=vmem, size = 0x20000, scoped, tag = 'input window, operand 1, single buffered']
    #allocation7 [shape = 's32[1]{0}', space=sflag, size = 0x4, scoped, tag = 'scoped memory for tpu_custom_call.1']
    #allocation8 [shape = 'u8[131072]{0}', space=vmem, size = 0x20000, scoped, tag = 'output window, operand 0']
    #allocation9 [shape = 'u8[2048]{0}', space=vmem, size = 0x800, scoped, tag = 'output window, operand 1']
    #allocation10 [shape = 's32[2]{0}', space=sflag, size = 0x8, scoped, tag = 'scoped memory for tpu_custom_call.1']
    %9 = vsyncpa [#allocation4], 0
    %s10 = scalar_lea.sflag [#allocation4], 1
    %11 = vsyncpa %s10, 0
    %12 = vsyncpa [#allocation7], 0
    %13 = vsyncpa [#allocation5], 0
    %s14 = scalar_lea.sflag [#allocation5], 1
    %15 = vsyncpa %s14, 0
    %16 = vsyncpa [#allocation10], 0
    %s17 = scalar_lea.sflag [#allocation10], 1
    %18 = vsyncpa %s17, 0
    loop: start=0, step=1, limit=4
    $region2: #{tpu_custom_call.1} parent=1 // loop_pre_header
      _
    $region3: #{tpu_custom_call.1} parent=1 // loop_header
      %s20 = sphi 0, %s24
      %p21 = scmp.ge.s32.totalorder %s20, 4
      %s27 = sphi 0, %s39
      %s28 = sphi 0, %s35
      %s29 = sphi 0, %s27
      %s30 = sphi 0, %s28
      %s31 = sphi 0, %s29
      %s32 = sphi 0, %s30
      %s44 = sphi 0, %s46
      %s47 = sphi 0, %s44
      %s48 = sphi 0, %s47
      %s64 = sphi 0, %s48
      %s68 = sphi 0, %s68
      %s70 = sphi 0, %s68
      %s71 = sphi 0, %s70
      %s85 = sphi 0, %s71
      %s91 = sphi 0, %s93
      %s94 = sphi 0, %s91
      %s95 = sphi 0, %s94
      %s111 = sphi 0, %s95
      %s117 = sphi 0, %s119
      %s120 = sphi 0, %s117
      %s121 = sphi 0, %s120
      %s137 = sphi 0, %s121
    $region4: #{tpu_custom_call.1} parent=1 // loop_header_branch
      %23 = sbr.rel (%p21) target = $region8
    $region5: #{tpu_custom_call.1} parent=1 // loop_body
      %s25 = ssub.s32 %s20, 1
      %s26 = ssub.s32 %s20, 2
      %s33 = sadd.s32 1, %s28
      %p34 = scmp.ge.s32.totalorder %s33, 1
      %s35 = scalar_select %p34, 0, %s33
      %s36 = sadd.s32 1, %s27
      %s37 = scalar_select %p34, %s36, %s27
      %p38 = scmp.ge.s32.totalorder %s37, 2
      %s39 = scalar_select %p38, 0, %s37
      %s40 = ssub.s32 %s27, %s39
      %s41 = ssub.s32 %s28, %s35
      %s42 = sor.u32 %s40, %s41
      %p43 = scmp.eq.s32.totalorder %s42, 0
      %s45 = sadd.s32 %s44, 1
      %s46 = scalar_select %p43, %s44, %s45
      %p49 = pneg %p43
      %p50 = scmp.eq.s32.totalorder %s20, 1
      %p51 = por %p49, %p50
      %p52 = scmp.ne.s32.totalorder %s44, %s47
      %p53 = scmp.eq.s32.totalorder %s20, 0
      %p54 = por %p52, %p53
      %p55 = scmp.ne.s32.totalorder %s44, %s47
      %p56 = scmp.eq.s32.totalorder %s25, 1
      %p57 = por %p55, %p56
      %p58 = scmp.ne.s32.totalorder %s47, %s48
      %p59 = scmp.eq.s32.totalorder %s25, 0
      %p60 = por %p58, %p59
      %p61 = scmp.ne.s32.totalorder %s47, %s48
      %p62 = scmp.eq.s32.totalorder %s26, 1
      %p63 = por %p61, %p62
      %p65 = scmp.ne.s32.totalorder %s48, %s64
      %p66 = scmp.eq.s32.totalorder %s26, 0
      %p67 = por %p65, %p66
      %s69 = sadd.s32 %s68, 1
      %p72 = scmp.eq.s32.totalorder %s20, 1
      %p73 = scmp.ne.s32.totalorder %s68, %s70
      %p74 = scmp.eq.s32.totalorder %s20, 0
      %p75 = por %p73, %p74
      %p76 = scmp.ne.s32.totalorder %s68, %s70
      %p77 = scmp.eq.s32.totalorder %s25, 1
      %p78 = por %p76, %p77
      %p79 = scmp.ne.s32.totalorder %s70, %s71
      %p80 = scmp.eq.s32.totalorder %s25, 0
      %p81 = por %p79, %p80
      %p82 = scmp.ne.s32.totalorder %s70, %s71
      %p83 = scmp.eq.s32.totalorder %s26, 1
      %p84 = por %p82, %p83
      %p86 = scmp.ne.s32.totalorder %s71, %s85
      %p87 = scmp.eq.s32.totalorder %s26, 0
      %p88 = por %p86, %p87
      %s89 = ssub.s32 %s27, %s39
      %p90 = scmp.eq.s32.totalorder %s89, 0
      %s92 = sadd.s32 %s91, 1
      %s93 = scalar_select %p90, %s91, %s92
      %p96 = pneg %p90
      %p97 = scmp.eq.s32.totalorder %s20, 1
      %p98 = por %p96, %p97
      %p99 = scmp.ne.s32.totalorder %s91, %s94
      %p100 = scmp.eq.s32.totalorder %s20, 0
      %p101 = por %p99, %p100
      %p102 = scmp.ne.s32.totalorder %s91, %s94
      %p103 = scmp.eq.s32.totalorder %s25, 1
      %p104 = por %p102, %p103
      %p105 = scmp.ne.s32.totalorder %s94, %s95
      %p106 = scmp.eq.s32.totalorder %s25, 0
      %p107 = por %p105, %p106
      %p108 = scmp.ne.s32.totalorder %s94, %s95
      %p109 = scmp.eq.s32.totalorder %s26, 1
      %p110 = por %p108, %p109
      %p112 = scmp.ne.s32.totalorder %s95, %s111
      %p113 = scmp.eq.s32.totalorder %s26, 0
      %p114 = por %p112, %p113
      %s115 = ssub.s32 %s27, %s39
      %p116 = scmp.eq.s32.totalorder %s115, 0
      %s118 = sadd.s32 %s117, 1
      %s119 = scalar_select %p116, %s117, %s118
      %p122 = pneg %p116
      %p123 = scmp.eq.s32.totalorder %s20, 1
      %p124 = por %p122, %p123
      %p125 = scmp.ne.s32.totalorder %s117, %s120
      %p126 = scmp.eq.s32.totalorder %s20, 0
      %p127 = por %p125, %p126
      %p128 = scmp.ne.s32.totalorder %s117, %s120
      %p129 = scmp.eq.s32.totalorder %s25, 1
      %p130 = por %p128, %p129
      %p131 = scmp.ne.s32.totalorder %s120, %s121
      %p132 = scmp.eq.s32.totalorder %s25, 0
      %p133 = por %p131, %p132
      %p134 = scmp.ne.s32.totalorder %s120, %s121
      %p135 = scmp.eq.s32.totalorder %s26, 1
      %p136 = por %p134, %p135
      %p138 = scmp.ne.s32.totalorder %s121, %s137
      %p139 = scmp.eq.s32.totalorder %s26, 0
      %p140 = por %p138, %p139
      %p141 = scmp.le.s32.totalorder 1, %s20
      %p142 = scmp.lt.s32.totalorder %s20, 3
      %p143 = pnand %p141, %p142
      %p144 = pneg %p143
      // Predicated region
      $region9: #{tpu_custom_call.1} parent=5 // pred_check
        _
      $region10: #{tpu_custom_call.1} parent=5 // pred_check_branch
        %146 = sbr.rel (%p143) target = $region12
      $region11: #{tpu_custom_call.1} parent=5 // pred_region
        %s147 = ssub.s32 %s20, 1
        // Predicated region
        $region13: #{tpu_custom_call.1} parent=11 // pred_check
          %p148 = pneg %p81
        $region14: #{tpu_custom_call.1} parent=11 // pred_check_branch
          %150 = sbr.rel (%p148) target = $region16
        $region15: #{tpu_custom_call.1} parent=11 // pred_region
          %152 = vsyncadd [#allocation7], 0
          %s153 = sshll.u32 %s1, 4
          %s154 = int_to_ptr.hbm [resolvable:$true] %s153
          %s155 = sshll.u32 [#allocation6], 4
          %s156 = int_to_ptr.vmem [resolvable:$true] %s155
          %161 = dma.hbm_to_vmem [thread:$0]  %s154, 4096, %s156, [#allocation7], 64, 64, 4
        $region16: #{tpu_custom_call.1} parent=11 // pred_fallthru
          _
      $region12: #{tpu_custom_call.1} parent=5 // pred_fallthru
        _
      %p162 = scmp.lt.s32.totalorder %s20, 2
      // Predicated region
      $region17: #{tpu_custom_call.1} parent=5 // pred_check
        %p163 = pneg %p162
      $region18: #{tpu_custom_call.1} parent=5 // pred_check_branch
        %165 = sbr.rel (%p163) target = $region20
      $region19: #{tpu_custom_call.1} parent=5 // pred_region
        // Predicated region
        $region21: #{tpu_custom_call.1} parent=19 // pred_check
          %p166 = pneg %p54
        $region22: #{tpu_custom_call.1} parent=19 // pred_check_branch
          %168 = sbr.rel (%p166) target = $region24
        $region23: #{tpu_custom_call.1} parent=19 // pred_region
          %s169 = sand.u32 %s44, 1
          %s170 = scalar_lea.sflag [#allocation4], %s169
          %s171 = sand.u32 %s44, 1
          %s172 = smul.addr %s171, 512
          %s173 = scalar_lea.vmem [#allocation3], %s172
          %s174 = smul.u32 32, %s27
          %s175 = smul.u32 4, %s28
          %177 = vsyncadd %s170, 0
          %s178 = smul.addr %s174, 4
          %s179 = sadd.s32 %s175, %s178
          %s180 = smul.addr %s179, 4
          %s181 = scalar_lea.hbm %s0, %s180
          %s182 = sshll.u32 %s181, 4
          %s183 = int_to_ptr.hbm [resolvable:$true] %s182
          %s184 = sshll.u32 %s173, 4
          %s185 = int_to_ptr.vmem [resolvable:$true] %s184
          %190 = dma.hbm_to_vmem [thread:$0]  %s183, 8192, %s185, %s170, 256, 256, 16
        $region24: #{tpu_custom_call.1} parent=19 // pred_fallthru
          _
      $region20: #{tpu_custom_call.1} parent=5 // pred_fallthru
        _
      %p191 = scmp.le.s32.totalorder 1, %s20
      %p192 = scmp.lt.s32.totalorder %s20, 3
      %p193 = pnand %p191, %p192
      %p194 = pneg %p193
      // Predicated region
      $region25: #{tpu_custom_call.1} parent=5 // pred_check
        _
      $region26: #{tpu_custom_call.1} parent=5 // pred_check_branch
        %196 = sbr.rel (%p193) target = $region28
      $region27: #{tpu_custom_call.1} parent=5 // pred_region
        %s197 = ssub.s32 %s20, 1
        %s198 = sand.u32 %s47, 1
        %s199 = scalar_lea.sflag [#allocation4], %s198
        %s200 = sand.u32 %s47, 1
        %s201 = smul.addr %s200, 512
        %s202 = scalar_lea.vmem [#allocation3], %s201
        // Predicated region
        $region29: #{tpu_custom_call.1} parent=27 // pred_check
          %p203 = pneg %p60
        $region30: #{tpu_custom_call.1} parent=27 // pred_check_branch
          %205 = sbr.rel (%p203) target = $region32
        $region31: #{tpu_custom_call.1} parent=27 // pred_region
          %207 = dma.done %s199, 8192
        $region32: #{tpu_custom_call.1} parent=27 // pred_fallthru
          _
        // Predicated region
        $region33: #{tpu_custom_call.1} parent=27 // pred_check
          %p208 = pneg %p81
        $region34: #{tpu_custom_call.1} parent=27 // pred_check_branch
          %210 = sbr.rel (%p208) target = $region36
        $region35: #{tpu_custom_call.1} parent=27 // pred_region
          %212 = dma.done [#allocation7], 4096
        $region36: #{tpu_custom_call.1} parent=27 // pred_fallthru
          _
        %s213 = sand.u32 %s47, 1
        %s214 = scalar_lea.sflag [#allocation4], %s213
        %s215 = sand.u32 %s47, 1
        %s216 = smul.addr %s215, 512
        %s217 = scalar_lea.vmem [#allocation3], %s216
        %p218 = pneg %p60
        %p219 = pneg %p57
        %p220 = pneg %p81
        %p221 = pneg %p78
        %p222 = pneg %p107
        %p223 = pneg %p104
        %s224 = sand.u32 %s94, 1
        %s225 = scalar_lea.sflag [#allocation5], %s224
        %s226 = sand.u32 %s94, 1
        %s227 = smul.addr %s226, 128
        %s228 = scalar_lea.vmem [#allocation8], %s227
        %p229 = pneg %p133
        %p230 = pneg %p130
        %s231 = sand.u32 %s120, 1
        %s232 = scalar_lea.sflag [#allocation10], %s231
        %s233 = sand.u32 %s120, 1
        %s234 = smul.addr %s233, 2
        %s235 = scalar_lea.vmem [#allocation9], %s234
        %s236 = smul.u32 32, %s29
        %s237 = smul.u32 4, %s30
        %s238 = smul.u32 32, %s29
        %p239 = scmp.eq.s32.totalorder %s30, 0
        // Predicated region
        $region37: #{tpu_custom_call.1} parent=27 // pred_check
          %p240 = pneg %p239
        $region38: #{tpu_custom_call.1} parent=27 // pred_check_branch
          %242 = sbr.rel (%p240) target = $region40
        $region39: #{tpu_custom_call.1} parent=27 // pred_region
          %243 = vst [vmem:[#allocation2] sm:$0xff] 0.0
          %244 = vst [vmem:[#allocation2 + $0x8] sm:$0xff] 0.0
          %245 = vst [vmem:[#allocation2 + $0x10] sm:$0xff] 0.0
          %246 = vst [vmem:[#allocation2 + $0x18] sm:$0xff] 0.0
          %247 = vst [vmem:[#allocation2 + $0x20] sm:$0xff] 0.0
          %248 = vst [vmem:[#allocation2 + $0x28] sm:$0xff] 0.0
          %249 = vst [vmem:[#allocation2 + $0x30] sm:$0xff] 0.0
          %250 = vst [vmem:[#allocation2 + $0x38] sm:$0xff] 0.0
          %251 = vst [vmem:[#allocation2 + $0x40] sm:$0xff] 0.0
          %252 = vst [vmem:[#allocation2 + $0x48] sm:$0xff] 0.0
          %253 = vst [vmem:[#allocation2 + $0x50] sm:$0xff] 0.0
          %254 = vst [vmem:[#allocation2 + $0x58] sm:$0xff] 0.0
          %255 = vst [vmem:[#allocation2 + $0x60] sm:$0xff] 0.0
          %256 = vst [vmem:[#allocation2 + $0x68] sm:$0xff] 0.0
          %257 = vst [vmem:[#allocation2 + $0x70] sm:$0xff] 0.0
          %258 = vst [vmem:[#allocation2 + $0x78] sm:$0xff] 0.0
          %259 = vst [vmem:[#allocation2 + $0x80] sm:$0xff] 0.0
          %260 = vst [vmem:[#allocation2 + $0x88] sm:$0xff] 0.0
          %261 = vst [vmem:[#allocation2 + $0x90] sm:$0xff] 0.0
          %262 = vst [vmem:[#allocation2 + $0x98] sm:$0xff] 0.0
          %263 = vst [vmem:[#allocation2 + $0xa0] sm:$0xff] 0.0
          %264 = vst [vmem:[#allocation2 + $0xa8] sm:$0xff] 0.0
          %265 = vst [vmem:[#allocation2 + $0xb0] sm:$0xff] 0.0
          %266 = vst [vmem:[#allocation2 + $0xb8] sm:$0xff] 0.0
          %267 = vst [vmem:[#allocation2 + $0xc0] sm:$0xff] 0.0
          %268 = vst [vmem:[#allocation2 + $0xc8] sm:$0xff] 0.0
          %269 = vst [vmem:[#allocation2 + $0xd0] sm:$0xff] 0.0
          %270 = vst [vmem:[#allocation2 + $0xd8] sm:$0xff] 0.0
          %271 = vst [vmem:[#allocation2 + $0xe0] sm:$0xff] 0.0
          %272 = vst [vmem:[#allocation2 + $0xe8] sm:$0xff] 0.0
          %273 = vst [vmem:[#allocation2 + $0xf0] sm:$0xff] 0.0
          %274 = vst [vmem:[#allocation2 + $0xf8] sm:$0xff] 0.0
        $region40: #{tpu_custom_call.1} parent=27 // pred_fallthru
          _
        %s275 = smul.u32 %s30, 512
        %s276 = sshra.s32 %s275, 3
        %s277 = sand.u32 %s275, 7
        %s278 = smul.addr %s276, 4
        %s279 = scalar_lea.vmem [#allocation6], %s278
        %v280 = vld [vmem:[%s279] sm:$0xf]
        %v281 = vld [vmem:[%s279 + $0x4] sm:$0xf]
        %v282 = vld [vmem:[%s279 + $0x8] sm:$0xf]
        %v283 = vld [vmem:[%s279 + $0xc] sm:$0xf]
        %v284 = vld [vmem:[%s279 + $0x10] sm:$0xf]
        %v285 = vld [vmem:[%s279 + $0x14] sm:$0xf]
        %v286 = vld [vmem:[%s279 + $0x18] sm:$0xf]
        %v287 = vld [vmem:[%s279 + $0x1c] sm:$0xf]
        %v288 = vld [vmem:[%s279 + $0x20] sm:$0xf]
        %v289 = vld [vmem:[%s279 + $0x24] sm:$0xf]
        %v290 = vld [vmem:[%s279 + $0x28] sm:$0xf]
        %v291 = vld [vmem:[%s279 + $0x2c] sm:$0xf]
        %v292 = vld [vmem:[%s279 + $0x30] sm:$0xf]
        %v293 = vld [vmem:[%s279 + $0x34] sm:$0xf]
        %v294 = vld [vmem:[%s279 + $0x38] sm:$0xf]
        %v295 = vld [vmem:[%s279 + $0x3c] sm:$0xf]
        %v296 = vld [vmem:[%s279 + $0x40] sm:$0xf]
        %v297 = vld [vmem:[%s279 + $0x44] sm:$0xf]
        %v298 = vld [vmem:[%s279 + $0x48] sm:$0xf]
        %v299 = vld [vmem:[%s279 + $0x4c] sm:$0xf]
        %v300 = vld [vmem:[%s279 + $0x50] sm:$0xf]
        %v301 = vld [vmem:[%s279 + $0x54] sm:$0xf]
        %v302 = vld [vmem:[%s279 + $0x58] sm:$0xf]
        %v303 = vld [vmem:[%s279 + $0x5c] sm:$0xf]
        %v304 = vld [vmem:[%s279 + $0x60] sm:$0xf]
        %v305 = vld [vmem:[%s279 + $0x64] sm:$0xf]
        %v306 = vld [vmem:[%s279 + $0x68] sm:$0xf]
        %v307 = vld [vmem:[%s279 + $0x6c] sm:$0xf]
        %v308 = vld [vmem:[%s279 + $0x70] sm:$0xf]
        %v309 = vld [vmem:[%s279 + $0x74] sm:$0xf]
        %v310 = vld [vmem:[%s279 + $0x78] sm:$0xf]
        %v311 = vld [vmem:[%s279 + $0x7c] sm:$0xf]
        %v312 = vld [vmem:[%s279 + $0x80] sm:$0xf]
        %v313 = vld [vmem:[%s279 + $0x84] sm:$0xf]
        %v314 = vld [vmem:[%s279 + $0x88] sm:$0xf]
        %v315 = vld [vmem:[%s279 + $0x8c] sm:$0xf]
        %v316 = vld [vmem:[%s279 + $0x90] sm:$0xf]
        %v317 = vld [vmem:[%s279 + $0x94] sm:$0xf]
        %v318 = vld [vmem:[%s279 + $0x98] sm:$0xf]
        %v319 = vld [vmem:[%s279 + $0x9c] sm:$0xf]
        %v320 = vld [vmem:[%s279 + $0xa0] sm:$0xf]
        %v321 = vld [vmem:[%s279 + $0xa4] sm:$0xf]
        %v322 = vld [vmem:[%s279 + $0xa8] sm:$0xf]
        %v323 = vld [vmem:[%s279 + $0xac] sm:$0xf]
        %v324 = vld [vmem:[%s279 + $0xb0] sm:$0xf]
        %v325 = vld [vmem:[%s279 + $0xb4] sm:$0xf]
        %v326 = vld [vmem:[%s279 + $0xb8] sm:$0xf]
        %v327 = vld [vmem:[%s279 + $0xbc] sm:$0xf]
        %v328 = vld [vmem:[%s279 + $0xc0] sm:$0xf]
        %v329 = vld [vmem:[%s279 + $0xc4] sm:$0xf]
        %v330 = vld [vmem:[%s279 + $0xc8] sm:$0xf]
        %v331 = vld [vmem:[%s279 + $0xcc] sm:$0xf]
        %v332 = vld [vmem:[%s279 + $0xd0] sm:$0xf]
        %v333 = vld [vmem:[%s279 + $0xd4] sm:$0xf]
        %v334 = vld [vmem:[%s279 + $0xd8] sm:$0xf]
        %v335 = vld [vmem:[%s279 + $0xdc] sm:$0xf]
        %v336 = vld [vmem:[%s279 + $0xe0] sm:$0xf]
        %v337 = vld [vmem:[%s279 + $0xe4] sm:$0xf]
        %v338 = vld [vmem:[%s279 + $0xe8] sm:$0xf]
        %v339 = vld [vmem:[%s279 + $0xec] sm:$0xf]
        %v340 = vld [vmem:[%s279 + $0xf0] sm:$0xf]
        %v341 = vld [vmem:[%s279 + $0xf4] sm:$0xf]
        %v342 = vld [vmem:[%s279 + $0xf8] sm:$0xf]
        %v343 = vld [vmem:[%s279 + $0xfc] sm:$0xf]
        %v344 = vld [vmem:[#allocation2] sm:$0xff]
        %v345 = vld [vmem:[#allocation2 + $0x8] sm:$0xff]
        %v346 = vld [vmem:[#allocation2 + $0x10] sm:$0xff]
        %v347 = vld [vmem:[#allocation2 + $0x18] sm:$0xff]
        %v348 = vld [vmem:[#allocation2 + $0x20] sm:$0xff]
        %v349 = vld [vmem:[#allocation2 + $0x28] sm:$0xff]
        %v350 = vld [vmem:[#allocation2 + $0x30] sm:$0xff]
        %v351 = vld [vmem:[#allocation2 + $0x38] sm:$0xff]
        %v352 = vld [vmem:[#allocation2 + $0x40] sm:$0xff]
        %v353 = vld [vmem:[#allocation2 + $0x48] sm:$0xff]
        %v354 = vld [vmem:[#allocation2 + $0x50] sm:$0xff]
        %v355 = vld [vmem:[#allocation2 + $0x58] sm:$0xff]
        %v356 = vld [vmem:[#allocation2 + $0x60] sm:$0xff]
        %v357 = vld [vmem:[#allocation2 + $0x68] sm:$0xff]
        %v358 = vld [vmem:[#allocation2 + $0x70] sm:$0xff]
        %v359 = vld [vmem:[#allocation2 + $0x78] sm:$0xff]
        %v360 = vld [vmem:[#allocation2 + $0x80] sm:$0xff]
        %v361 = vld [vmem:[#allocation2 + $0x88] sm:$0xff]
        %v362 = vld [vmem:[#allocation2 + $0x90] sm:$0xff]
        %v363 = vld [vmem:[#allocation2 + $0x98] sm:$0xff]
        %v364 = vld [vmem:[#allocation2 + $0xa0] sm:$0xff]
        %v365 = vld [vmem:[#allocation2 + $0xa8] sm:$0xff]
        %v366 = vld [vmem:[#allocation2 + $0xb0] sm:$0xff]
        %v367 = vld [vmem:[#allocation2 + $0xb8] sm:$0xff]
        %v368 = vld [vmem:[#allocation2 + $0xc0] sm:$0xff]
        %v369 = vld [vmem:[#allocation2 + $0xc8] sm:$0xff]
        %v370 = vld [vmem:[#allocation2 + $0xd0] sm:$0xff]
        %v371 = vld [vmem:[#allocation2 + $0xd8] sm:$0xff]
        %v372 = vld [vmem:[#allocation2 + $0xe0] sm:$0xff]
        %v373 = vld [vmem:[#allocation2 + $0xe8] sm:$0xff]
        %v374 = vld [vmem:[#allocation2 + $0xf0] sm:$0xff]
        %v375 = vld [vmem:[#allocation2 + $0xf8] sm:$0xff]
        %v376 = vld [vmem:[%s202] sm:$0xff]
        %v377 = vld [vmem:[%s202 + $0x8] sm:$0xff]
        %v378 = vld [vmem:[%s202 + $0x10] sm:$0xff]
        %v379 = vld [vmem:[%s202 + $0x18] sm:$0xff]
        %v380 = vld [vmem:[%s202 + $0x20] sm:$0xff]
        %v381 = vld [vmem:[%s202 + $0x28] sm:$0xff]
        %v382 = vld [vmem:[%s202 + $0x30] sm:$0xff]
        %v383 = vld [vmem:[%s202 + $0x38] sm:$0xff]
        %v384 = vld [vmem:[%s202 + $0x40] sm:$0xff]
        %v385 = vld [vmem:[%s202 + $0x48] sm:$0xff]
        %v386 = vld [vmem:[%s202 + $0x50] sm:$0xff]
        %v387 = vld [vmem:[%s202 + $0x58] sm:$0xff]
        %v388 = vld [vmem:[%s202 + $0x60] sm:$0xff]
        %v389 = vld [vmem:[%s202 + $0x68] sm:$0xff]
        %v390 = vld [vmem:[%s202 + $0x70] sm:$0xff]
        %v391 = vld [vmem:[%s202 + $0x78] sm:$0xff]
        %v392 = vld [vmem:[%s202 + $0x80] sm:$0xff]
        %v393 = vld [vmem:[%s202 + $0x88] sm:$0xff]
        %v394 = vld [vmem:[%s202 + $0x90] sm:$0xff]
        %v395 = vld [vmem:[%s202 + $0x98] sm:$0xff]
        %v396 = vld [vmem:[%s202 + $0xa0] sm:$0xff]
        %v397 = vld [vmem:[%s202 + $0xa8] sm:$0xff]
        %v398 = vld [vmem:[%s202 + $0xb0] sm:$0xff]
        %v399 = vld [vmem:[%s202 + $0xb8] sm:$0xff]
        %v400 = vld [vmem:[%s202 + $0xc0] sm:$0xff]
        %v401 = vld [vmem:[%s202 + $0xc8] sm:$0xff]
        %v402 = vld [vmem:[%s202 + $0xd0] sm:$0xff]
        %v403 = vld [vmem:[%s202 + $0xd8] sm:$0xff]
        %v404 = vld [vmem:[%s202 + $0xe0] sm:$0xff]
        %v405 = vld [vmem:[%s202 + $0xe8] sm:$0xff]
        %v406 = vld [vmem:[%s202 + $0xf0] sm:$0xff]
        %v407 = vld [vmem:[%s202 + $0xf8] sm:$0xff]
        %v408 = vld [vmem:[%s202 + $0x100] sm:$0xff]
        %v409 = vld [vmem:[%s202 + $0x108] sm:$0xff]
        %v410 = vld [vmem:[%s202 + $0x110] sm:$0xff]
        %v411 = vld [vmem:[%s202 + $0x118] sm:$0xff]
        %v412 = vld [vmem:[%s202 + $0x120] sm:$0xff]
        %v413 = vld [vmem:[%s202 + $0x128] sm:$0xff]
        %v414 = vld [vmem:[%s202 + $0x130] sm:$0xff]
        %v415 = vld [vmem:[%s202 + $0x138] sm:$0xff]
        %v416 = vld [vmem:[%s202 + $0x140] sm:$0xff]
        %v417 = vld [vmem:[%s202 + $0x148] sm:$0xff]
        %v418 = vld [vmem:[%s202 + $0x150] sm:$0xff]
        %v419 = vld [vmem:[%s202 + $0x158] sm:$0xff]
        %v420 = vld [vmem:[%s202 + $0x160] sm:$0xff]
        %v421 = vld [vmem:[%s202 + $0x168] sm:$0xff]
        %v422 = vld [vmem:[%s202 + $0x170] sm:$0xff]
        %v423 = vld [vmem:[%s202 + $0x178] sm:$0xff]
        %v424 = vld [vmem:[%s202 + $0x180] sm:$0xff]
        %v425 = vld [vmem:[%s202 + $0x188] sm:$0xff]
        %v426 = vld [vmem:[%s202 + $0x190] sm:$0xff]
        %v427 = vld [vmem:[%s202 + $0x198] sm:$0xff]
        %v428 = vld [vmem:[%s202 + $0x1a0] sm:$0xff]
        %v429 = vld [vmem:[%s202 + $0x1a8] sm:$0xff]
        %v430 = vld [vmem:[%s202 + $0x1b0] sm:$0xff]
        %v431 = vld [vmem:[%s202 + $0x1b8] sm:$0xff]
        %v432 = vld [vmem:[%s202 + $0x1c0] sm:$0xff]
        %v433 = vld [vmem:[%s202 + $0x1c8] sm:$0xff]
        %v434 = vld [vmem:[%s202 + $0x1d0] sm:$0xff]
        %v435 = vld [vmem:[%s202 + $0x1d8] sm:$0xff]
        %v436 = vld [vmem:[%s202 + $0x1e0] sm:$0xff]
        %v437 = vld [vmem:[%s202 + $0x1e8] sm:$0xff]
        %v438 = vld [vmem:[%s202 + $0x1f0] sm:$0xff]
        %v439 = vld [vmem:[%s202 + $0x1f8] sm:$0xff]
        %v504 = vunpack.c.l.b16 %v376
        %v505 = vunpack.c.h.b16 %v376
        %v506 = vunpack.c.l.b16 %v377
        %v507 = vunpack.c.h.b16 %v377
        %v508 = vunpack.c.l.b16 %v378
        %v509 = vunpack.c.h.b16 %v378
        %v510 = vunpack.c.l.b16 %v379
        %v511 = vunpack.c.h.b16 %v379
        %v512 = vunpack.c.l.b16 %v380
        %v513 = vunpack.c.h.b16 %v380
        %v514 = vunpack.c.l.b16 %v381
        %v515 = vunpack.c.h.b16 %v381
        %v516 = vunpack.c.l.b16 %v382
        %v517 = vunpack.c.h.b16 %v382
        %v518 = vunpack.c.l.b16 %v383
        %v519 = vunpack.c.h.b16 %v383
        %v520 = vunpack.c.l.b16 %v384
        %v521 = vunpack.c.h.b16 %v384
        %v522 = vunpack.c.l.b16 %v385
        %v523 = vunpack.c.h.b16 %v385
        %v524 = vunpack.c.l.b16 %v386
        %v525 = vunpack.c.h.b16 %v386
        %v526 = vunpack.c.l.b16 %v387
        %v527 = vunpack.c.h.b16 %v387
        %v528 = vunpack.c.l.b16 %v388
        %v529 = vunpack.c.h.b16 %v388
        %v530 = vunpack.c.l.b16 %v389
        %v531 = vunpack.c.h.b16 %v389
        %v532 = vunpack.c.l.b16 %v390
        %v533 = vunpack.c.h.b16 %v390
        %v534 = vunpack.c.l.b16 %v391
        %v535 = vunpack.c.h.b16 %v391
        %v536 = vunpack.c.l.b16 %v392
        %v537 = vunpack.c.h.b16 %v392
        %v538 = vunpack.c.l.b16 %v393
        %v539 = vunpack.c.h.b16 %v393
        %v540 = vunpack.c.l.b16 %v394
        %v541 = vunpack.c.h.b16 %v394
        %v542 = vunpack.c.l.b16 %v395
        %v543 = vunpack.c.h.b16 %v395
        %v544 = vunpack.c.l.b16 %v396
        %v545 = vunpack.c.h.b16 %v396
        %v546 = vunpack.c.l.b16 %v397
        %v547 = vunpack.c.h.b16 %v397
        %v548 = vunpack.c.l.b16 %v398
        %v549 = vunpack.c.h.b16 %v398
        %v550 = vunpack.c.l.b16 %v399
        %v551 = vunpack.c.h.b16 %v399
        %v552 = vunpack.c.l.b16 %v400
        %v553 = vunpack.c.h.b16 %v400
        %v554 = vunpack.c.l.b16 %v401
        %v555 = vunpack.c.h.b16 %v401
        %v556 = vunpack.c.l.b16 %v402
        %v557 = vunpack.c.h.b16 %v402
        %v558 = vunpack.c.l.b16 %v403
        %v559 = vunpack.c.h.b16 %v403
        %v560 = vunpack.c.l.b16 %v404
        %v561 = vunpack.c.h.b16 %v404
        %v562 = vunpack.c.l.b16 %v405
        %v563 = vunpack.c.h.b16 %v405
        %v564 = vunpack.c.l.b16 %v406
        %v565 = vunpack.c.h.b16 %v406
        %v566 = vunpack.c.l.b16 %v407
        %v567 = vunpack.c.h.b16 %v407
        %v568 = vunpack.c.l.b16 %v408
        %v569 = vunpack.c.h.b16 %v408
        %v570 = vunpack.c.l.b16 %v409
        %v571 = vunpack.c.h.b16 %v409
        %v572 = vunpack.c.l.b16 %v410
        %v573 = vunpack.c.h.b16 %v410
        %v574 = vunpack.c.l.b16 %v411
        %v575 = vunpack.c.h.b16 %v411
        %v576 = vunpack.c.l.b16 %v412
        %v577 = vunpack.c.h.b16 %v412
        %v578 = vunpack.c.l.b16 %v413
        %v579 = vunpack.c.h.b16 %v413
        %v580 = vunpack.c.l.b16 %v414
        %v581 = vunpack.c.h.b16 %v414
        %v582 = vunpack.c.l.b16 %v415
        %v583 = vunpack.c.h.b16 %v415
        %v584 = vunpack.c.l.b16 %v416
        %v585 = vunpack.c.h.b16 %v416
        %v586 = vunpack.c.l.b16 %v417
        %v587 = vunpack.c.h.b16 %v417
        %v588 = vunpack.c.l.b16 %v418
        %v589 = vunpack.c.h.b16 %v418
        %v590 = vunpack.c.l.b16 %v419
        %v591 = vunpack.c.h.b16 %v419
        %v592 = vunpack.c.l.b16 %v420
        %v593 = vunpack.c.h.b16 %v420
        %v594 = vunpack.c.l.b16 %v421
        %v595 = vunpack.c.h.b16 %v421
        %v596 = vunpack.c.l.b16 %v422
        %v597 = vunpack.c.h.b16 %v422
        %v598 = vunpack.c.l.b16 %v423
        %v599 = vunpack.c.h.b16 %v423
        %v600 = vunpack.c.l.b16 %v424
        %v601 = vunpack.c.h.b16 %v424
        %v602 = vunpack.c.l.b16 %v425
        %v603 = vunpack.c.h.b16 %v425
        %v604 = vunpack.c.l.b16 %v426
        %v605 = vunpack.c.h.b16 %v426
        %v606 = vunpack.c.l.b16 %v427
        %v607 = vunpack.c.h.b16 %v427
        %v608 = vunpack.c.l.b16 %v428
        %v609 = vunpack.c.h.b16 %v428
        %v610 = vunpack.c.l.b16 %v429
        %v611 = vunpack.c.h.b16 %v429
        %v612 = vunpack.c.l.b16 %v430
        %v613 = vunpack.c.h.b16 %v430
        %v614 = vunpack.c.l.b16 %v431
        %v615 = vunpack.c.h.b16 %v431
        %v616 = vunpack.c.l.b16 %v432
        %v617 = vunpack.c.h.b16 %v432
        %v618 = vunpack.c.l.b16 %v433
        %v619 = vunpack.c.h.b16 %v433
        %v620 = vunpack.c.l.b16 %v434
        %v621 = vunpack.c.h.b16 %v434
        %v622 = vunpack.c.l.b16 %v435
        %v623 = vunpack.c.h.b16 %v435
        %v624 = vunpack.c.l.b16 %v436
        %v625 = vunpack.c.h.b16 %v436
        %v626 = vunpack.c.l.b16 %v437
        %v627 = vunpack.c.h.b16 %v437
        %v628 = vunpack.c.l.b16 %v438
        %v629 = vunpack.c.h.b16 %v438
        %v630 = vunpack.c.l.b16 %v439
        %v631 = vunpack.c.h.b16 %v439
        %v632 = vpack.c.b16 %v508, %v504
        %v633 = vpack.c.b16 %v509, %v505
        %v634 = vpack.c.b16 %v510, %v506
        %v635 = vpack.c.b16 %v511, %v507
        %v636 = vpack.c.b16 %v516, %v512
        %v637 = vpack.c.b16 %v517, %v513
        %v638 = vpack.c.b16 %v518, %v514
        %v639 = vpack.c.b16 %v519, %v515
        %v640 = vpack.c.b16 %v524, %v520
        %v641 = vpack.c.b16 %v525, %v521
        %v642 = vpack.c.b16 %v526, %v522
        %v643 = vpack.c.b16 %v527, %v523
        %v644 = vpack.c.b16 %v532, %v528
        %v645 = vpack.c.b16 %v533, %v529
        %v646 = vpack.c.b16 %v534, %v530
        %v647 = vpack.c.b16 %v535, %v531
        %v648 = vpack.c.b16 %v540, %v536
        %v649 = vpack.c.b16 %v541, %v537
        %v650 = vpack.c.b16 %v542, %v538
        %v651 = vpack.c.b16 %v543, %v539
        %v652 = vpack.c.b16 %v548, %v544
        %v653 = vpack.c.b16 %v549, %v545
        %v654 = vpack.c.b16 %v550, %v546
        %v655 = vpack.c.b16 %v551, %v547
        %v656 = vpack.c.b16 %v556, %v552
        %v657 = vpack.c.b16 %v557, %v553
        %v658 = vpack.c.b16 %v558, %v554
        %v659 = vpack.c.b16 %v559, %v555
        %v660 = vpack.c.b16 %v564, %v560
        %v661 = vpack.c.b16 %v565, %v561
        %v662 = vpack.c.b16 %v566, %v562
        %v663 = vpack.c.b16 %v567, %v563
        %v664 = vpack.c.b16 %v572, %v568
        %v665 = vpack.c.b16 %v573, %v569
        %v666 = vpack.c.b16 %v574, %v570
        %v667 = vpack.c.b16 %v575, %v571
        %v668 = vpack.c.b16 %v580, %v576
        %v669 = vpack.c.b16 %v581, %v577
        %v670 = vpack.c.b16 %v582, %v578
        %v671 = vpack.c.b16 %v583, %v579
        %v672 = vpack.c.b16 %v588, %v584
        %v673 = vpack.c.b16 %v589, %v585
        %v674 = vpack.c.b16 %v590, %v586
        %v675 = vpack.c.b16 %v591, %v587
        %v676 = vpack.c.b16 %v596, %v592
        %v677 = vpack.c.b16 %v597, %v593
        %v678 = vpack.c.b16 %v598, %v594
        %v679 = vpack.c.b16 %v599, %v595
        %v680 = vpack.c.b16 %v604, %v600
        %v681 = vpack.c.b16 %v605, %v601
        %v682 = vpack.c.b16 %v606, %v602
        %v683 = vpack.c.b16 %v607, %v603
        %v684 = vpack.c.b16 %v612, %v608
        %v685 = vpack.c.b16 %v613, %v609
        %v686 = vpack.c.b16 %v614, %v610
        %v687 = vpack.c.b16 %v615, %v611
        %v688 = vpack.c.b16 %v620, %v616
        %v689 = vpack.c.b16 %v621, %v617
        %v690 = vpack.c.b16 %v622, %v618
        %v691 = vpack.c.b16 %v623, %v619
        %v692 = vpack.c.b16 %v628, %v624
        %v693 = vpack.c.b16 %v629, %v625
        %v694 = vpack.c.b16 %v630, %v626
        %v695 = vpack.c.b16 %v631, %v627
        %v824 = vunpack.c.l.b16 %v280
        %v825 = vunpack.c.l.b16 %v281
        %v826 = vunpack.c.l.b16 %v282
        %v827 = vunpack.c.l.b16 %v283
        %v828 = vunpack.c.l.b16 %v284
        %v829 = vunpack.c.l.b16 %v285
        %v830 = vunpack.c.l.b16 %v286
        %v831 = vunpack.c.l.b16 %v287
        %v832 = vunpack.c.l.b16 %v288
        %v833 = vunpack.c.l.b16 %v289
        %v834 = vunpack.c.l.b16 %v290
        %v835 = vunpack.c.l.b16 %v291
        %v836 = vunpack.c.l.b16 %v292
        %v837 = vunpack.c.l.b16 %v293
        %v838 = vunpack.c.l.b16 %v294
        %v839 = vunpack.c.l.b16 %v295
        %v840 = vunpack.c.l.b16 %v296
        %v841 = vunpack.c.l.b16 %v297
        %v842 = vunpack.c.l.b16 %v298
        %v843 = vunpack.c.l.b16 %v299
        %v844 = vunpack.c.l.b16 %v300
        %v845 = vunpack.c.l.b16 %v301
        %v846 = vunpack.c.l.b16 %v302
        %v847 = vunpack.c.l.b16 %v303
        %v848 = vunpack.c.l.b16 %v304
        %v849 = vunpack.c.l.b16 %v305
        %v850 = vunpack.c.l.b16 %v306
        %v851 = vunpack.c.l.b16 %v307
        %v852 = vunpack.c.l.b16 %v308
        %v853 = vunpack.c.l.b16 %v309
        %v854 = vunpack.c.l.b16 %v310
        %v855 = vunpack.c.l.b16 %v311
        %v856 = vunpack.c.l.b16 %v312
        %v857 = vunpack.c.l.b16 %v313
        %v858 = vunpack.c.l.b16 %v314
        %v859 = vunpack.c.l.b16 %v315
        %v860 = vunpack.c.l.b16 %v316
        %v861 = vunpack.c.l.b16 %v317
        %v862 = vunpack.c.l.b16 %v318
        %v863 = vunpack.c.l.b16 %v319
        %v864 = vunpack.c.l.b16 %v320
        %v865 = vunpack.c.l.b16 %v321
        %v866 = vunpack.c.l.b16 %v322
        %v867 = vunpack.c.l.b16 %v323
        %v868 = vunpack.c.l.b16 %v324
        %v869 = vunpack.c.l.b16 %v325
        %v870 = vunpack.c.l.b16 %v326
        %v871 = vunpack.c.l.b16 %v327
        %v872 = vunpack.c.l.b16 %v328
        %v873 = vunpack.c.l.b16 %v329
        %v874 = vunpack.c.l.b16 %v330
        %v875 = vunpack.c.l.b16 %v331
        %v876 = vunpack.c.l.b16 %v332
        %v877 = vunpack.c.l.b16 %v333
        %v878 = vunpack.c.l.b16 %v334
        %v879 = vunpack.c.l.b16 %v335
        %v880 = vunpack.c.l.b16 %v336
        %v881 = vunpack.c.l.b16 %v337
        %v882 = vunpack.c.l.b16 %v338
        %v883 = vunpack.c.l.b16 %v339
        %v884 = vunpack.c.l.b16 %v340
        %v885 = vunpack.c.l.b16 %v341
        %v886 = vunpack.c.l.b16 %v342
        %v887 = vunpack.c.l.b16 %v343
        %v888 = vpack.c.b16 %v825, %v824
        %v889 = vpack.c.b16 %v827, %v826
        %v890 = vpack.c.b16 %v829, %v828
        %v891 = vpack.c.b16 %v831, %v830
        %v892 = vpack.c.b16 %v833, %v832
        %v893 = vpack.c.b16 %v835, %v834
        %v894 = vpack.c.b16 %v837, %v836
        %v895 = vpack.c.b16 %v839, %v838
        %v896 = vpack.c.b16 %v841, %v840
        %v897 = vpack.c.b16 %v843, %v842
        %v898 = vpack.c.b16 %v845, %v844
        %v899 = vpack.c.b16 %v847, %v846
        %v900 = vpack.c.b16 %v849, %v848
        %v901 = vpack.c.b16 %v851, %v850
        %v902 = vpack.c.b16 %v853, %v852
        %v903 = vpack.c.b16 %v855, %v854
        %v904 = vpack.c.b16 %v857, %v856
        %v905 = vpack.c.b16 %v859, %v858
        %v906 = vpack.c.b16 %v861, %v860
        %v907 = vpack.c.b16 %v863, %v862
        %v908 = vpack.c.b16 %v865, %v864
        %v909 = vpack.c.b16 %v867, %v866
        %v910 = vpack.c.b16 %v869, %v868
        %v911 = vpack.c.b16 %v871, %v870
        %v912 = vpack.c.b16 %v873, %v872
        %v913 = vpack.c.b16 %v875, %v874
        %v914 = vpack.c.b16 %v877, %v876
        %v915 = vpack.c.b16 %v879, %v878
        %v916 = vpack.c.b16 %v881, %v880
        %v917 = vpack.c.b16 %v883, %v882
        %v918 = vpack.c.b16 %v885, %v884
        %v919 = vpack.c.b16 %v887, %v886
        %952 = vmatpush.bf16.msra.mxu0 %v895
        %953 = vmatpush.bf16.msra.mxu0 %v894
        %954 = vmatpush.bf16.msra.mxu0 %v893
        %955 = vmatpush.bf16.msra.mxu0 %v892
        %956 = vmatpush.bf16.msra.mxu0 %v891
        %957 = vmatpush.bf16.msra.mxu0 %v890
        %958 = vmatpush.bf16.msra.mxu0 %v889
        %959 = vmatpush.bf16.msra.mxu0 %v888
        %960 = vmatmul.bf16.gmra.mxu0 %v632
        %v961 = vpop.f32.mrf.mxu0
        %v962 = vadd.f32 0.0, %v961
        %v963 = vpop.f32.mrf.mxu0
        %v964 = vadd.f32 0.0, %v963
        %965 = vmatmul.bf16.gmra.mxu0 %v636
        %v966 = vpop.f32.mrf.mxu0
        %v967 = vadd.f32 0.0, %v966
        %v968 = vpop.f32.mrf.mxu0
        %v969 = vadd.f32 0.0, %v968
        %970 = vmatmul.bf16.gmra.mxu0 %v640
        %v971 = vpop.f32.mrf.mxu0
        %v972 = vadd.f32 0.0, %v971
        %v973 = vpop.f32.mrf.mxu0
        %v974 = vadd.f32 0.0, %v973
        %975 = vmatmul.bf16.gmra.mxu0 %v644
        %v976 = vpop.f32.mrf.mxu0
        %v977 = vadd.f32 0.0, %v976
        %v978 = vpop.f32.mrf.mxu0
        %v979 = vadd.f32 0.0, %v978
        %980 = vmatmul.bf16.gmra.mxu0 %v648
        %v981 = vpop.f32.mrf.mxu0
        %v982 = vadd.f32 0.0, %v981
        %v983 = vpop.f32.mrf.mxu0
        %v984 = vadd.f32 0.0, %v983
        %985 = vmatmul.bf16.gmra.mxu0 %v652
        %v986 = vpop.f32.mrf.mxu0
        %v987 = vadd.f32 0.0, %v986
        %v988 = vpop.f32.mrf.mxu0
        %v989 = vadd.f32 0.0, %v988
        %990 = vmatmul.bf16.gmra.mxu0 %v656
        %v991 = vpop.f32.mrf.mxu0
        %v992 = vadd.f32 0.0, %v991
        %v993 = vpop.f32.mrf.mxu0
        %v994 = vadd.f32 0.0, %v993
        %995 = vmatmul.bf16.gmra.mxu0 %v660
        %v996 = vpop.f32.mrf.mxu0
        %v997 = vadd.f32 0.0, %v996
        %v998 = vpop.f32.mrf.mxu0
        %v999 = vadd.f32 0.0, %v998
        %1000 = vmatmul.bf16.gmra.mxu0 %v664
        %v1001 = vpop.f32.mrf.mxu0
        %v1002 = vadd.f32 0.0, %v1001
        %v1003 = vpop.f32.mrf.mxu0
        %v1004 = vadd.f32 0.0, %v1003
        %1005 = vmatmul.bf16.gmra.mxu0 %v668
        %v1006 = vpop.f32.mrf.mxu0
        %v1007 = vadd.f32 0.0, %v1006
        %v1008 = vpop.f32.mrf.mxu0
        %v1009 = vadd.f32 0.0, %v1008
        %1010 = vmatmul.bf16.gmra.mxu0 %v672
        %v1011 = vpop.f32.mrf.mxu0
        %v1012 = vadd.f32 0.0, %v1011
        %v1013 = vpop.f32.mrf.mxu0
        %v1014 = vadd.f32 0.0, %v1013
        %1015 = vmatmul.bf16.gmra.mxu0 %v676
        %v1016 = vpop.f32.mrf.mxu0
        %v1017 = vadd.f32 0.0, %v1016
        %v1018 = vpop.f32.mrf.mxu0
        %v1019 = vadd.f32 0.0, %v1018
        %1020 = vmatmul.bf16.gmra.mxu0 %v680
        %v1021 = vpop.f32.mrf.mxu0
        %v1022 = vadd.f32 0.0, %v1021
        %v1023 = vpop.f32.mrf.mxu0
        %v1024 = vadd.f32 0.0, %v1023
        %1025 = vmatmul.bf16.gmra.mxu0 %v684
        %v1026 = vpop.f32.mrf.mxu0
        %v1027 = vadd.f32 0.0, %v1026
        %v1028 = vpop.f32.mrf.mxu0
        %v1029 = vadd.f32 0.0, %v1028
        %1030 = vmatmul.bf16.gmra.mxu0 %v688
        %v1031 = vpop.f32.mrf.mxu0
        %v1032 = vadd.f32 0.0, %v1031
        %v1033 = vpop.f32.mrf.mxu0
        %v1034 = vadd.f32 0.0, %v1033
        %1035 = vmatmul.bf16.gmra.mxu0 %v692
        %v1036 = vpop.f32.mrf.mxu0
        %v1037 = vadd.f32 0.0, %v1036
        %v1038 = vpop.f32.mrf.mxu0
        %v1039 = vadd.f32 0.0, %v1038
        %1040 = vdwg.mxu0
        %1041 = vmatpush.bf16.msra.mxu0 %v903
        %1042 = vmatpush.bf16.msra.mxu0 %v902
        %1043 = vmatpush.bf16.msra.mxu0 %v901
        %1044 = vmatpush.bf16.msra.mxu0 %v900
        %1045 = vmatpush.bf16.msra.mxu0 %v899
        %1046 = vmatpush.bf16.msra.mxu0 %v898
        %1047 = vmatpush.bf16.msra.mxu0 %v897
        %1048 = vmatpush.bf16.msra.mxu0 %v896
        %1049 = vmatmul.bf16.gmra.mxu0 %v633
        %v1050 = vpop.f32.mrf.mxu0
        %v1051 = vadd.f32 %v962, %v1050
        %v1052 = vpop.f32.mrf.mxu0
        %v1053 = vadd.f32 %v964, %v1052
        %1054 = vmatmul.bf16.gmra.mxu0 %v637
        %v1055 = vpop.f32.mrf.mxu0
        %v1056 = vadd.f32 %v967, %v1055
        %v1057 = vpop.f32.mrf.mxu0
        %v1058 = vadd.f32 %v969, %v1057
        %1059 = vmatmul.bf16.gmra.mxu0 %v641
        %v1060 = vpop.f32.mrf.mxu0
        %v1061 = vadd.f32 %v972, %v1060
        %v1062 = vpop.f32.mrf.mxu0
        %v1063 = vadd.f32 %v974, %v1062
        %1064 = vmatmul.bf16.gmra.mxu0 %v645
        %v1065 = vpop.f32.mrf.mxu0
        %v1066 = vadd.f32 %v977, %v1065
        %v1067 = vpop.f32.mrf.mxu0
        %v1068 = vadd.f32 %v979, %v1067
        %1069 = vmatmul.bf16.gmra.mxu0 %v649
        %v1070 = vpop.f32.mrf.mxu0
        %v1071 = vadd.f32 %v982, %v1070
        %v1072 = vpop.f32.mrf.mxu0
        %v1073 = vadd.f32 %v984, %v1072
        %1074 = vmatmul.bf16.gmra.mxu0 %v653
        %v1075 = vpop.f32.mrf.mxu0
        %v1076 = vadd.f32 %v987, %v1075
        %v1077 = vpop.f32.mrf.mxu0
        %v1078 = vadd.f32 %v989, %v1077
        %1079 = vmatmul.bf16.gmra.mxu0 %v657
        %v1080 = vpop.f32.mrf.mxu0
        %v1081 = vadd.f32 %v992, %v1080
        %v1082 = vpop.f32.mrf.mxu0
        %v1083 = vadd.f32 %v994, %v1082
        %1084 = vmatmul.bf16.gmra.mxu0 %v661
        %v1085 = vpop.f32.mrf.mxu0
        %v1086 = vadd.f32 %v997, %v1085
        %v1087 = vpop.f32.mrf.mxu0
        %v1088 = vadd.f32 %v999, %v1087
        %1089 = vmatmul.bf16.gmra.mxu0 %v665
        %v1090 = vpop.f32.mrf.mxu0
        %v1091 = vadd.f32 %v1002, %v1090
        %v1092 = vpop.f32.mrf.mxu0
        %v1093 = vadd.f32 %v1004, %v1092
        %1094 = vmatmul.bf16.gmra.mxu0 %v669
        %v1095 = vpop.f32.mrf.mxu0
        %v1096 = vadd.f32 %v1007, %v1095
        %v1097 = vpop.f32.mrf.mxu0
        %v1098 = vadd.f32 %v1009, %v1097
        %1099 = vmatmul.bf16.gmra.mxu0 %v673
        %v1100 = vpop.f32.mrf.mxu0
        %v1101 = vadd.f32 %v1012, %v1100
        %v1102 = vpop.f32.mrf.mxu0
        %v1103 = vadd.f32 %v1014, %v1102
        %1104 = vmatmul.bf16.gmra.mxu0 %v677
        %v1105 = vpop.f32.mrf.mxu0
        %v1106 = vadd.f32 %v1017, %v1105
        %v1107 = vpop.f32.mrf.mxu0
        %v1108 = vadd.f32 %v1019, %v1107
        %1109 = vmatmul.bf16.gmra.mxu0 %v681
        %v1110 = vpop.f32.mrf.mxu0
        %v1111 = vadd.f32 %v1022, %v1110
        %v1112 = vpop.f32.mrf.mxu0
        %v1113 = vadd.f32 %v1024, %v1112
        %1114 = vmatmul.bf16.gmra.mxu0 %v685
        %v1115 = vpop.f32.mrf.mxu0
        %v1116 = vadd.f32 %v1027, %v1115
        %v1117 = vpop.f32.mrf.mxu0
        %v1118 = vadd.f32 %v1029, %v1117
        %1119 = vmatmul.bf16.gmra.mxu0 %v689
        %v1120 = vpop.f32.mrf.mxu0
        %v1121 = vadd.f32 %v1032, %v1120
        %v1122 = vpop.f32.mrf.mxu0
        %v1123 = vadd.f32 %v1034, %v1122
        %1124 = vmatmul.bf16.gmra.mxu0 %v693
        %v1125 = vpop.f32.mrf.mxu0
        %v1126 = vadd.f32 %v1037, %v1125
        %v1127 = vpop.f32.mrf.mxu0
        %v1128 = vadd.f32 %v1039, %v1127
        %1129 = vdwg.mxu0
        %1130 = vmatpush.bf16.msra.mxu0 %v911
        %1131 = vmatpush.bf16.msra.mxu0 %v910
        %1132 = vmatpush.bf16.msra.mxu0 %v909
        %1133 = vmatpush.bf16.msra.mxu0 %v908
        %1134 = vmatpush.bf16.msra.mxu0 %v907
        %1135 = vmatpush.bf16.msra.mxu0 %v906
        %1136 = vmatpush.bf16.msra.mxu0 %v905
        %1137 = vmatpush.bf16.msra.mxu0 %v904
        %1138 = vmatmul.bf16.gmra.mxu0 %v634
        %v1139 = vpop.f32.mrf.mxu0
        %v1140 = vadd.f32 %v1051, %v1139
        %v1141 = vpop.f32.mrf.mxu0
        %v1142 = vadd.f32 %v1053, %v1141
        %1143 = vmatmul.bf16.gmra.mxu0 %v638
        %v1144 = vpop.f32.mrf.mxu0
        %v1145 = vadd.f32 %v1056, %v1144
        %v1146 = vpop.f32.mrf.mxu0
        %v1147 = vadd.f32 %v1058, %v1146
        %1148 = vmatmul.bf16.gmra.mxu0 %v642
        %v1149 = vpop.f32.mrf.mxu0
        %v1150 = vadd.f32 %v1061, %v1149
        %v1151 = vpop.f32.mrf.mxu0
        %v1152 = vadd.f32 %v1063, %v1151
        %1153 = vmatmul.bf16.gmra.mxu0 %v646
        %v1154 = vpop.f32.mrf.mxu0
        %v1155 = vadd.f32 %v1066, %v1154
        %v1156 = vpop.f32.mrf.mxu0
        %v1157 = vadd.f32 %v1068, %v1156
        %1158 = vmatmul.bf16.gmra.mxu0 %v650
        %v1159 = vpop.f32.mrf.mxu0
        %v1160 = vadd.f32 %v1071, %v1159
        %v1161 = vpop.f32.mrf.mxu0
        %v1162 = vadd.f32 %v1073, %v1161
        %1163 = vmatmul.bf16.gmra.mxu0 %v654
        %v1164 = vpop.f32.mrf.mxu0
        %v1165 = vadd.f32 %v1076, %v1164
        %v1166 = vpop.f32.mrf.mxu0
        %v1167 = vadd.f32 %v1078, %v1166
        %1168 = vmatmul.bf16.gmra.mxu0 %v658
        %v1169 = vpop.f32.mrf.mxu0
        %v1170 = vadd.f32 %v1081, %v1169
        %v1171 = vpop.f32.mrf.mxu0
        %v1172 = vadd.f32 %v1083, %v1171
        %1173 = vmatmul.bf16.gmra.mxu0 %v662
        %v1174 = vpop.f32.mrf.mxu0
        %v1175 = vadd.f32 %v1086, %v1174
        %v1176 = vpop.f32.mrf.mxu0
        %v1177 = vadd.f32 %v1088, %v1176
        %1178 = vmatmul.bf16.gmra.mxu0 %v666
        %v1179 = vpop.f32.mrf.mxu0
        %v1180 = vadd.f32 %v1091, %v1179
        %v1181 = vpop.f32.mrf.mxu0
        %v1182 = vadd.f32 %v1093, %v1181
        %1183 = vmatmul.bf16.gmra.mxu0 %v670
        %v1184 = vpop.f32.mrf.mxu0
        %v1185 = vadd.f32 %v1096, %v1184
        %v1186 = vpop.f32.mrf.mxu0
        %v1187 = vadd.f32 %v1098, %v1186
        %1188 = vmatmul.bf16.gmra.mxu0 %v674
        %v1189 = vpop.f32.mrf.mxu0
        %v1190 = vadd.f32 %v1101, %v1189
        %v1191 = vpop.f32.mrf.mxu0
        %v1192 = vadd.f32 %v1103, %v1191
        %1193 = vmatmul.bf16.gmra.mxu0 %v678
        %v1194 = vpop.f32.mrf.mxu0
        %v1195 = vadd.f32 %v1106, %v1194
        %v1196 = vpop.f32.mrf.mxu0
        %v1197 = vadd.f32 %v1108, %v1196
        %1198 = vmatmul.bf16.gmra.mxu0 %v682
        %v1199 = vpop.f32.mrf.mxu0
        %v1200 = vadd.f32 %v1111, %v1199
        %v1201 = vpop.f32.mrf.mxu0
        %v1202 = vadd.f32 %v1113, %v1201
        %1203 = vmatmul.bf16.gmra.mxu0 %v686
        %v1204 = vpop.f32.mrf.mxu0
        %v1205 = vadd.f32 %v1116, %v1204
        %v1206 = vpop.f32.mrf.mxu0
        %v1207 = vadd.f32 %v1118, %v1206
        %1208 = vmatmul.bf16.gmra.mxu0 %v690
        %v1209 = vpop.f32.mrf.mxu0
        %v1210 = vadd.f32 %v1121, %v1209
        %v1211 = vpop.f32.mrf.mxu0
        %v1212 = vadd.f32 %v1123, %v1211
        %1213 = vmatmul.bf16.gmra.mxu0 %v694
        %v1214 = vpop.f32.mrf.mxu0
        %v1215 = vadd.f32 %v1126, %v1214
        %v1216 = vpop.f32.mrf.mxu0
        %v1217 = vadd.f32 %v1128, %v1216
        %1218 = vdwg.mxu0
        %1219 = vmatpush.bf16.msra.mxu0 %v919
        %1220 = vmatpush.bf16.msra.mxu0 %v918
        %1221 = vmatpush.bf16.msra.mxu0 %v917
        %1222 = vmatpush.bf16.msra.mxu0 %v916
        %1223 = vmatpush.bf16.msra.mxu0 %v915
        %1224 = vmatpush.bf16.msra.mxu0 %v914
        %1225 = vmatpush.bf16.msra.mxu0 %v913
        %1226 = vmatpush.bf16.msra.mxu0 %v912
        %1227 = vmatmul.bf16.gmra.mxu0 %v635
        %v1228 = vpop.f32.mrf.mxu0
        %v1229 = vadd.f32 %v1140, %v1228
        %v1230 = vpop.f32.mrf.mxu0
        %v1231 = vadd.f32 %v1142, %v1230
        %1232 = vmatmul.bf16.gmra.mxu0 %v639
        %v1233 = vpop.f32.mrf.mxu0
        %v1234 = vadd.f32 %v1145, %v1233
        %v1235 = vpop.f32.mrf.mxu0
        %v1236 = vadd.f32 %v1147, %v1235
        %1237 = vmatmul.bf16.gmra.mxu0 %v643
        %v1238 = vpop.f32.mrf.mxu0
        %v1239 = vadd.f32 %v1150, %v1238
        %v1240 = vpop.f32.mrf.mxu0
        %v1241 = vadd.f32 %v1152, %v1240
        %1242 = vmatmul.bf16.gmra.mxu0 %v647
        %v1243 = vpop.f32.mrf.mxu0
        %v1244 = vadd.f32 %v1155, %v1243
        %v1245 = vpop.f32.mrf.mxu0
        %v1246 = vadd.f32 %v1157, %v1245
        %1247 = vmatmul.bf16.gmra.mxu0 %v651
        %v1248 = vpop.f32.mrf.mxu0
        %v1249 = vadd.f32 %v1160, %v1248
        %v1250 = vpop.f32.mrf.mxu0
        %v1251 = vadd.f32 %v1162, %v1250
        %1252 = vmatmul.bf16.gmra.mxu0 %v655
        %v1253 = vpop.f32.mrf.mxu0
        %v1254 = vadd.f32 %v1165, %v1253
        %v1255 = vpop.f32.mrf.mxu0
        %v1256 = vadd.f32 %v1167, %v1255
        %1257 = vmatmul.bf16.gmra.mxu0 %v659
        %v1258 = vpop.f32.mrf.mxu0
        %v1259 = vadd.f32 %v1170, %v1258
        %v1260 = vpop.f32.mrf.mxu0
        %v1261 = vadd.f32 %v1172, %v1260
        %1262 = vmatmul.bf16.gmra.mxu0 %v663
        %v1263 = vpop.f32.mrf.mxu0
        %v1264 = vadd.f32 %v1175, %v1263
        %v1265 = vpop.f32.mrf.mxu0
        %v1266 = vadd.f32 %v1177, %v1265
        %1267 = vmatmul.bf16.gmra.mxu0 %v667
        %v1268 = vpop.f32.mrf.mxu0
        %v1269 = vadd.f32 %v1180, %v1268
        %v1270 = vpop.f32.mrf.mxu0
        %v1271 = vadd.f32 %v1182, %v1270
        %1272 = vmatmul.bf16.gmra.mxu0 %v671
        %v1273 = vpop.f32.mrf.mxu0
        %v1274 = vadd.f32 %v1185, %v1273
        %v1275 = vpop.f32.mrf.mxu0
        %v1276 = vadd.f32 %v1187, %v1275
        %1277 = vmatmul.bf16.gmra.mxu0 %v675
        %v1278 = vpop.f32.mrf.mxu0
        %v1279 = vadd.f32 %v1190, %v1278
        %v1280 = vpop.f32.mrf.mxu0
        %v1281 = vadd.f32 %v1192, %v1280
        %1282 = vmatmul.bf16.gmra.mxu0 %v679
        %v1283 = vpop.f32.mrf.mxu0
        %v1284 = vadd.f32 %v1195, %v1283
        %v1285 = vpop.f32.mrf.mxu0
        %v1286 = vadd.f32 %v1197, %v1285
        %1287 = vmatmul.bf16.gmra.mxu0 %v683
        %v1288 = vpop.f32.mrf.mxu0
        %v1289 = vadd.f32 %v1200, %v1288
        %v1290 = vpop.f32.mrf.mxu0
        %v1291 = vadd.f32 %v1202, %v1290
        %1292 = vmatmul.bf16.gmra.mxu0 %v687
        %v1293 = vpop.f32.mrf.mxu0
        %v1294 = vadd.f32 %v1205, %v1293
        %v1295 = vpop.f32.mrf.mxu0
        %v1296 = vadd.f32 %v1207, %v1295
        %1297 = vmatmul.bf16.gmra.mxu0 %v691
        %v1298 = vpop.f32.mrf.mxu0
        %v1299 = vadd.f32 %v1210, %v1298
        %v1300 = vpop.f32.mrf.mxu0
        %v1301 = vadd.f32 %v1212, %v1300
        %1302 = vmatmul.bf16.gmra.mxu0 %v695
        %v1303 = vpop.f32.mrf.mxu0
        %v1304 = vadd.f32 %v1215, %v1303
        %v1305 = vpop.f32.mrf.mxu0
        %v1306 = vadd.f32 %v1217, %v1305
        %1307 = vdwg.mxu0
        %v1308 = vadd.f32 %v344, %v1229
        %v1309 = vadd.f32 %v345, %v1231
        %v1310 = vadd.f32 %v346, %v1234
        %v1311 = vadd.f32 %v347, %v1236
        %v1312 = vadd.f32 %v348, %v1239
        %v1313 = vadd.f32 %v349, %v1241
        %v1314 = vadd.f32 %v350, %v1244
        %v1315 = vadd.f32 %v351, %v1246
        %v1316 = vadd.f32 %v352, %v1249
        %v1317 = vadd.f32 %v353, %v1251
        %v1318 = vadd.f32 %v354, %v1254
        %v1319 = vadd.f32 %v355, %v1256
        %v1320 = vadd.f32 %v356, %v1259
        %v1321 = vadd.f32 %v357, %v1261
        %v1322 = vadd.f32 %v358, %v1264
        %v1323 = vadd.f32 %v359, %v1266
        %v1324 = vadd.f32 %v360, %v1269
        %v1325 = vadd.f32 %v361, %v1271
        %v1326 = vadd.f32 %v362, %v1274
        %v1327 = vadd.f32 %v363, %v1276
        %v1328 = vadd.f32 %v364, %v1279
        %v1329 = vadd.f32 %v365, %v1281
        %v1330 = vadd.f32 %v366, %v1284
        %v1331 = vadd.f32 %v367, %v1286
        %v1332 = vadd.f32 %v368, %v1289
        %v1333 = vadd.f32 %v369, %v1291
        %v1334 = vadd.f32 %v370, %v1294
        %v1335 = vadd.f32 %v371, %v1296
        %v1336 = vadd.f32 %v372, %v1299
        %v1337 = vadd.f32 %v373, %v1301
        %v1338 = vadd.f32 %v374, %v1304
        %v1339 = vadd.f32 %v375, %v1306
        %1340 = vst [vmem:[#allocation2] sm:$0xff] %v1308
        %1341 = vst [vmem:[#allocation2 + $0x8] sm:$0xff] %v1309
        %1342 = vst [vmem:[#allocation2 + $0x10] sm:$0xff] %v1310
        %1343 = vst [vmem:[#allocation2 + $0x18] sm:$0xff] %v1311
        %1344 = vst [vmem:[#allocation2 + $0x20] sm:$0xff] %v1312
        %1345 = vst [vmem:[#allocation2 + $0x28] sm:$0xff] %v1313
        %1346 = vst [vmem:[#allocation2 + $0x30] sm:$0xff] %v1314
        %1347 = vst [vmem:[#allocation2 + $0x38] sm:$0xff] %v1315
        %1348 = vst [vmem:[#allocation2 + $0x40] sm:$0xff] %v1316
        %1349 = vst [vmem:[#allocation2 + $0x48] sm:$0xff] %v1317
        %1350 = vst [vmem:[#allocation2 + $0x50] sm:$0xff] %v1318
        %1351 = vst [vmem:[#allocation2 + $0x58] sm:$0xff] %v1319
        %1352 = vst [vmem:[#allocation2 + $0x60] sm:$0xff] %v1320
        %1353 = vst [vmem:[#allocation2 + $0x68] sm:$0xff] %v1321
        %1354 = vst [vmem:[#allocation2 + $0x70] sm:$0xff] %v1322
        %1355 = vst [vmem:[#allocation2 + $0x78] sm:$0xff] %v1323
        %1356 = vst [vmem:[#allocation2 + $0x80] sm:$0xff] %v1324
        %1357 = vst [vmem:[#allocation2 + $0x88] sm:$0xff] %v1325
        %1358 = vst [vmem:[#allocation2 + $0x90] sm:$0xff] %v1326
        %1359 = vst [vmem:[#allocation2 + $0x98] sm:$0xff] %v1327
        %1360 = vst [vmem:[#allocation2 + $0xa0] sm:$0xff] %v1328
        %1361 = vst [vmem:[#allocation2 + $0xa8] sm:$0xff] %v1329
        %1362 = vst [vmem:[#allocation2 + $0xb0] sm:$0xff] %v1330
        %1363 = vst [vmem:[#allocation2 + $0xb8] sm:$0xff] %v1331
        %1364 = vst [vmem:[#allocation2 + $0xc0] sm:$0xff] %v1332
        %1365 = vst [vmem:[#allocation2 + $0xc8] sm:$0xff] %v1333
        %1366 = vst [vmem:[#allocation2 + $0xd0] sm:$0xff] %v1334
        %1367 = vst [vmem:[#allocation2 + $0xd8] sm:$0xff] %v1335
        %1368 = vst [vmem:[#allocation2 + $0xe0] sm:$0xff] %v1336
        %1369 = vst [vmem:[#allocation2 + $0xe8] sm:$0xff] %v1337
        %1370 = vst [vmem:[#allocation2 + $0xf0] sm:$0xff] %v1338
        %1371 = vst [vmem:[#allocation2 + $0xf8] sm:$0xff] %v1339
        // Predicated region
        $region41: #{tpu_custom_call.1} parent=27 // pred_check
          %p1372 = pneg %p239
        $region42: #{tpu_custom_call.1} parent=27 // pred_check_branch
          %1374 = sbr.rel (%p1372) target = $region44
        $region43: #{tpu_custom_call.1} parent=27 // pred_region
          %v1375 = vld [vmem:[#allocation2] sm:$0xff]
          %v1376 = vld [vmem:[#allocation2 + $0x8] sm:$0xff]
          %v1377 = vld [vmem:[#allocation2 + $0x10] sm:$0xff]
          %v1378 = vld [vmem:[#allocation2 + $0x18] sm:$0xff]
          %v1379 = vld [vmem:[#allocation2 + $0x20] sm:$0xff]
          %v1380 = vld [vmem:[#allocation2 + $0x28] sm:$0xff]
          %v1381 = vld [vmem:[#allocation2 + $0x30] sm:$0xff]
          %v1382 = vld [vmem:[#allocation2 + $0x38] sm:$0xff]
          %v1383 = vld [vmem:[#allocation2 + $0x40] sm:$0xff]
          %v1384 = vld [vmem:[#allocation2 + $0x48] sm:$0xff]
          %v1385 = vld [vmem:[#allocation2 + $0x50] sm:$0xff]
          %v1386 = vld [vmem:[#allocation2 + $0x58] sm:$0xff]
          %v1387 = vld [vmem:[#allocation2 + $0x60] sm:$0xff]
          %v1388 = vld [vmem:[#allocation2 + $0x68] sm:$0xff]
          %v1389 = vld [vmem:[#allocation2 + $0x70] sm:$0xff]
          %v1390 = vld [vmem:[#allocation2 + $0x78] sm:$0xff]
          %v1391 = vld [vmem:[#allocation2 + $0x80] sm:$0xff]
          %v1392 = vld [vmem:[#allocation2 + $0x88] sm:$0xff]
          %v1393 = vld [vmem:[#allocation2 + $0x90] sm:$0xff]
          %v1394 = vld [vmem:[#allocation2 + $0x98] sm:$0xff]
          %v1395 = vld [vmem:[#allocation2 + $0xa0] sm:$0xff]
          %v1396 = vld [vmem:[#allocation2 + $0xa8] sm:$0xff]
          %v1397 = vld [vmem:[#allocation2 + $0xb0] sm:$0xff]
          %v1398 = vld [vmem:[#allocation2 + $0xb8] sm:$0xff]
          %v1399 = vld [vmem:[#allocation2 + $0xc0] sm:$0xff]
          %v1400 = vld [vmem:[#allocation2 + $0xc8] sm:$0xff]
          %v1401 = vld [vmem:[#allocation2 + $0xd0] sm:$0xff]
          %v1402 = vld [vmem:[#allocation2 + $0xd8] sm:$0xff]
          %v1403 = vld [vmem:[#allocation2 + $0xe0] sm:$0xff]
          %v1404 = vld [vmem:[#allocation2 + $0xe8] sm:$0xff]
          %v1405 = vld [vmem:[#allocation2 + $0xf0] sm:$0xff]
          %v1406 = vld [vmem:[#allocation2 + $0xf8] sm:$0xff]
          %v1407 = vadd.f32 %v1375, %v1376
          %v1408 = vadd.f32 %v1407, %v1377
          %v1409 = vadd.f32 %v1408, %v1378
          %v1410 = vadd.f32 %v1409, %v1379
          %v1411 = vadd.f32 %v1410, %v1380
          %v1412 = vadd.f32 %v1411, %v1381
          %v1413 = vadd.f32 %v1412, %v1382
          %v1414 = vadd.f32 %v1413, %v1383
          %v1415 = vadd.f32 %v1414, %v1384
          %v1416 = vadd.f32 %v1415, %v1385
          %v1417 = vadd.f32 %v1416, %v1386
          %v1418 = vadd.f32 %v1417, %v1387
          %v1419 = vadd.f32 %v1418, %v1388
          %v1420 = vadd.f32 %v1419, %v1389
          %v1421 = vadd.f32 %v1420, %v1390
          %v1422 = vadd.f32 %v1421, %v1391
          %v1423 = vadd.f32 %v1422, %v1392
          %v1424 = vadd.f32 %v1423, %v1393
          %v1425 = vadd.f32 %v1424, %v1394
          %v1426 = vadd.f32 %v1425, %v1395
          %v1427 = vadd.f32 %v1426, %v1396
          %v1428 = vadd.f32 %v1427, %v1397
          %v1429 = vadd.f32 %v1428, %v1398
          %v1430 = vadd.f32 %v1429, %v1399
          %v1431 = vadd.f32 %v1430, %v1400
          %v1432 = vadd.f32 %v1431, %v1401
          %v1433 = vadd.f32 %v1432, %v1402
          %v1434 = vadd.f32 %v1433, %v1403
          %v1435 = vadd.f32 %v1434, %v1404
          %v1436 = vadd.f32 %v1435, %v1405
          %v1437 = vadd.f32 %v1436, %v1406
          %v1438 = vrot.slane %v1437, 4
          %v1439 = vadd.f32 %v1437, %v1438
          %v1440 = vrot.slane %v1439, 2
          %v1441 = vadd.f32 %v1439, %v1440
          %v1442 = vrot.slane %v1441, 1
          %v1443 = vadd.f32 %v1441, %v1442
          %1444 = vst [vmem:[%s235] sm:$0x1] %v1443
          %v1445 = vmul.f32 %v1375, %v1375
          %v1446 = vmul.f32 %v1376, %v1376
          %v1447 = vmul.f32 %v1377, %v1377
          %v1448 = vmul.f32 %v1378, %v1378
          %v1449 = vmul.f32 %v1379, %v1379
          %v1450 = vmul.f32 %v1380, %v1380
          %v1451 = vmul.f32 %v1381, %v1381
          %v1452 = vmul.f32 %v1382, %v1382
          %v1453 = vmul.f32 %v1383, %v1383
          %v1454 = vmul.f32 %v1384, %v1384
          %v1455 = vmul.f32 %v1385, %v1385
          %v1456 = vmul.f32 %v1386, %v1386
          %v1457 = vmul.f32 %v1387, %v1387
          %v1458 = vmul.f32 %v1388, %v1388
          %v1459 = vmul.f32 %v1389, %v1389
          %v1460 = vmul.f32 %v1390, %v1390
          %v1461 = vmul.f32 %v1391, %v1391
          %v1462 = vmul.f32 %v1392, %v1392
          %v1463 = vmul.f32 %v1393, %v1393
          %v1464 = vmul.f32 %v1394, %v1394
          %v1465 = vmul.f32 %v1395, %v1395
          %v1466 = vmul.f32 %v1396, %v1396
          %v1467 = vmul.f32 %v1397, %v1397
          %v1468 = vmul.f32 %v1398, %v1398
          %v1469 = vmul.f32 %v1399, %v1399
          %v1470 = vmul.f32 %v1400, %v1400
          %v1471 = vmul.f32 %v1401, %v1401
          %v1472 = vmul.f32 %v1402, %v1402
          %v1473 = vmul.f32 %v1403, %v1403
          %v1474 = vmul.f32 %v1404, %v1404
          %v1475 = vmul.f32 %v1405, %v1405
          %v1476 = vmul.f32 %v1406, %v1406
          %v1477 = vadd.f32 %v1445, %v1446
          %v1478 = vadd.f32 %v1477, %v1447
          %v1479 = vadd.f32 %v1478, %v1448
          %v1480 = vadd.f32 %v1479, %v1449
          %v1481 = vadd.f32 %v1480, %v1450
          %v1482 = vadd.f32 %v1481, %v1451
          %v1483 = vadd.f32 %v1482, %v1452
          %v1484 = vadd.f32 %v1483, %v1453
          %v1485 = vadd.f32 %v1484, %v1454
          %v1486 = vadd.f32 %v1485, %v1455
          %v1487 = vadd.f32 %v1486, %v1456
          %v1488 = vadd.f32 %v1487, %v1457
          %v1489 = vadd.f32 %v1488, %v1458
          %v1490 = vadd.f32 %v1489, %v1459
          %v1491 = vadd.f32 %v1490, %v1460
          %v1492 = vadd.f32 %v1491, %v1461
          %v1493 = vadd.f32 %v1492, %v1462
          %v1494 = vadd.f32 %v1493, %v1463
          %v1495 = vadd.f32 %v1494, %v1464
          %v1496 = vadd.f32 %v1495, %v1465
          %v1497 = vadd.f32 %v1496, %v1466
          %v1498 = vadd.f32 %v1497, %v1467
          %v1499 = vadd.f32 %v1498, %v1468
          %v1500 = vadd.f32 %v1499, %v1469
          %v1501 = vadd.f32 %v1500, %v1470
          %v1502 = vadd.f32 %v1501, %v1471
          %v1503 = vadd.f32 %v1502, %v1472
          %v1504 = vadd.f32 %v1503, %v1473
          %v1505 = vadd.f32 %v1504, %v1474
          %v1506 = vadd.f32 %v1505, %v1475
          %v1507 = vadd.f32 %v1506, %v1476
          %v1508 = vrot.slane %v1507, 4
          %v1509 = vadd.f32 %v1507, %v1508
          %v1510 = vrot.slane %v1509, 2
          %v1511 = vadd.f32 %v1509, %v1510
          %v1512 = vrot.slane %v1511, 1
          %v1513 = vadd.f32 %v1511, %v1512
          %1514 = vst [vmem:[%s235 + $0x1] sm:$0x1] %v1513
          %v1515 = vpack.c.bf16 %v1375, %v1375
          %v1516 = vpack.c.bf16 %v1376, %v1376
          %v1517 = vpack.c.bf16 %v1377, %v1377
          %v1518 = vpack.c.bf16 %v1378, %v1378
          %v1519 = vpack.c.bf16 %v1379, %v1379
          %v1520 = vpack.c.bf16 %v1380, %v1380
          %v1521 = vpack.c.bf16 %v1381, %v1381
          %v1522 = vpack.c.bf16 %v1382, %v1382
          %v1523 = vpack.c.bf16 %v1383, %v1383
          %v1524 = vpack.c.bf16 %v1384, %v1384
          %v1525 = vpack.c.bf16 %v1385, %v1385
          %v1526 = vpack.c.bf16 %v1386, %v1386
          %v1527 = vpack.c.bf16 %v1387, %v1387
          %v1528 = vpack.c.bf16 %v1388, %v1388
          %v1529 = vpack.c.bf16 %v1389, %v1389
          %v1530 = vpack.c.bf16 %v1390, %v1390
          %v1531 = vpack.c.bf16 %v1391, %v1391
          %v1532 = vpack.c.bf16 %v1392, %v1392
          %v1533 = vpack.c.bf16 %v1393, %v1393
          %v1534 = vpack.c.bf16 %v1394, %v1394
          %v1535 = vpack.c.bf16 %v1395, %v1395
          %v1536 = vpack.c.bf16 %v1396, %v1396
          %v1537 = vpack.c.bf16 %v1397, %v1397
          %v1538 = vpack.c.bf16 %v1398, %v1398
          %v1539 = vpack.c.bf16 %v1399, %v1399
          %v1540 = vpack.c.bf16 %v1400, %v1400
          %v1541 = vpack.c.bf16 %v1401, %v1401
          %v1542 = vpack.c.bf16 %v1402, %v1402
          %v1543 = vpack.c.bf16 %v1403, %v1403
          %v1544 = vpack.c.bf16 %v1404, %v1404
          %v1545 = vpack.c.bf16 %v1405, %v1405
          %v1546 = vpack.c.bf16 %v1406, %v1406
          %1547 = vst [vmem:[%s228] sm:$0xf] %v1515
          %1548 = vst [vmem:[%s228 + $0x4] sm:$0xf] %v1516
          %1549 = vst [vmem:[%s228 + $0x8] sm:$0xf] %v1517
          %1550 = vst [vmem:[%s228 + $0xc] sm:$0xf] %v1518
          %1551 = vst [vmem:[%s228 + $0x10] sm:$0xf] %v1519
          %1552 = vst [vmem:[%s228 + $0x14] sm:$0xf] %v1520
          %1553 = vst [vmem:[%s228 + $0x18] sm:$0xf] %v1521
          %1554 = vst [vmem:[%s228 + $0x1c] sm:$0xf] %v1522
          %1555 = vst [vmem:[%s228 + $0x20] sm:$0xf] %v1523
          %1556 = vst [vmem:[%s228 + $0x24] sm:$0xf] %v1524
          %1557 = vst [vmem:[%s228 + $0x28] sm:$0xf] %v1525
          %1558 = vst [vmem:[%s228 + $0x2c] sm:$0xf] %v1526
          %1559 = vst [vmem:[%s228 + $0x30] sm:$0xf] %v1527
          %1560 = vst [vmem:[%s228 + $0x34] sm:$0xf] %v1528
          %1561 = vst [vmem:[%s228 + $0x38] sm:$0xf] %v1529
          %1562 = vst [vmem:[%s228 + $0x3c] sm:$0xf] %v1530
          %1563 = vst [vmem:[%s228 + $0x40] sm:$0xf] %v1531
          %1564 = vst [vmem:[%s228 + $0x44] sm:$0xf] %v1532
          %1565 = vst [vmem:[%s228 + $0x48] sm:$0xf] %v1533
          %1566 = vst [vmem:[%s228 + $0x4c] sm:$0xf] %v1534
          %1567 = vst [vmem:[%s228 + $0x50] sm:$0xf] %v1535
          %1568 = vst [vmem:[%s228 + $0x54] sm:$0xf] %v1536
          %1569 = vst [vmem:[%s228 + $0x58] sm:$0xf] %v1537
          %1570 = vst [vmem:[%s228 + $0x5c] sm:$0xf] %v1538
          %1571 = vst [vmem:[%s228 + $0x60] sm:$0xf] %v1539
          %1572 = vst [vmem:[%s228 + $0x64] sm:$0xf] %v1540
          %1573 = vst [vmem:[%s228 + $0x68] sm:$0xf] %v1541
          %1574 = vst [vmem:[%s228 + $0x6c] sm:$0xf] %v1542
          %1575 = vst [vmem:[%s228 + $0x70] sm:$0xf] %v1543
          %1576 = vst [vmem:[%s228 + $0x74] sm:$0xf] %v1544
          %1577 = vst [vmem:[%s228 + $0x78] sm:$0xf] %v1545
          %1578 = vst [vmem:[%s228 + $0x7c] sm:$0xf] %v1546
        $region44: #{tpu_custom_call.1} parent=27 // pred_fallthru
          _
        %s1579 = sand.u32 %s94, 1
        %s1580 = scalar_lea.sflag [#allocation5], %s1579
        %s1581 = sand.u32 %s94, 1
        %s1582 = smul.addr %s1581, 128
        %s1583 = scalar_lea.vmem [#allocation8], %s1582
        %s1584 = sand.u32 %s120, 1
        %s1585 = scalar_lea.sflag [#allocation10], %s1584
        %s1586 = sand.u32 %s120, 1
        %s1587 = smul.addr %s1586, 2
        %s1588 = scalar_lea.vmem [#allocation9], %s1587
        // Predicated region
        $region45: #{tpu_custom_call.1} parent=27 // pred_check
          %p1589 = pneg %p104
        $region46: #{tpu_custom_call.1} parent=27 // pred_check_branch
          %1591 = sbr.rel (%p1589) target = $region48
        $region47: #{tpu_custom_call.1} parent=27 // pred_region
          %s1592 = smul.u32 32, %s29
          %1594 = vsyncadd %s1580, 0
          %s1595 = smul.addr %s1592, 4
          %s1596 = scalar_lea.hbm %s2, %s1595
          %s1597 = sshll.u32 %s1583, 4
          %s1598 = int_to_ptr.vmem [resolvable:$true] %s1597
          %s1599 = sshll.u32 %s1596, 4
          %s1600 = int_to_ptr.hbm [resolvable:$true] %s1599
          %1605 = dma.vmem_to_hbm [thread:$0]  %s1598, 2048, %s1600, %s1580, 64, 64, 4
        $region48: #{tpu_custom_call.1} parent=27 // pred_fallthru
          _
        // Predicated region
        $region49: #{tpu_custom_call.1} parent=27 // pred_check
          %p1606 = pneg %p130
        $region50: #{tpu_custom_call.1} parent=27 // pred_check_branch
          %1608 = sbr.rel (%p1606) target = $region52
        $region51: #{tpu_custom_call.1} parent=27 // pred_region
          %1610 = vsyncadd %s1585, 0
          %s1611 = smul.addr %s29, 2
          %s1612 = scalar_lea.hbm %s3, %s1611
          %s1614 = sshll.u32 %s1588, 4
          %s1615 = int_to_ptr.vmem [resolvable:$true] %s1614
          %s1616 = sshll.u32 %s1612, 4
          %s1617 = int_to_ptr.hbm [resolvable:$true] %s1616
          %1619 = dma.vmem_to_hbm [thread:$0]  %s1615, 32, %s1617, %s1585
        $region52: #{tpu_custom_call.1} parent=27 // pred_fallthru
          _
      $region28: #{tpu_custom_call.1} parent=5 // pred_fallthru
        _
      %p1620 = scmp.le.s32.totalorder 2, %s20
      // Predicated region
      $region53: #{tpu_custom_call.1} parent=5 // pred_check
        %p1621 = pneg %p1620
      $region54: #{tpu_custom_call.1} parent=5 // pred_check_branch
        %1623 = sbr.rel (%p1621) target = $region56
      $region55: #{tpu_custom_call.1} parent=5 // pred_region
        %s1624 = ssub.s32 %s20, 2
        // Predicated region
        $region57: #{tpu_custom_call.1} parent=55 // pred_check
          %p1625 = pneg %p110
        $region58: #{tpu_custom_call.1} parent=55 // pred_check_branch
          %1627 = sbr.rel (%p1625) target = $region60
        $region59: #{tpu_custom_call.1} parent=55 // pred_region
          %s1628 = sand.u32 %s95, 1
          %s1629 = scalar_lea.sflag [#allocation5], %s1628
          %s1630 = sand.u32 %s95, 1
          %s1631 = smul.addr %s1630, 128
          %s1632 = scalar_lea.vmem [#allocation8], %s1631
          %1634 = dma.done %s1629, 2048
        $region60: #{tpu_custom_call.1} parent=55 // pred_fallthru
          _
        // Predicated region
        $region61: #{tpu_custom_call.1} parent=55 // pred_check
          %p1635 = pneg %p136
        $region62: #{tpu_custom_call.1} parent=55 // pred_check_branch
          %1637 = sbr.rel (%p1635) target = $region64
        $region63: #{tpu_custom_call.1} parent=55 // pred_region
          %s1638 = sand.u32 %s121, 1
          %s1639 = scalar_lea.sflag [#allocation10], %s1638
          %s1640 = sand.u32 %s121, 1
          %s1641 = smul.addr %s1640, 2
          %s1642 = scalar_lea.vmem [#allocation9], %s1641
          %1644 = dma.done %s1639, 32
        $region64: #{tpu_custom_call.1} parent=55 // pred_fallthru
          _
      $region56: #{tpu_custom_call.1} parent=5 // pred_fallthru
        _
    $region6: #{tpu_custom_call.1} parent=1 // loop_footer
      %s24 = sadd.s32 1, %s20
    $region7: #{tpu_custom_call.1} parent=1 // loop_footer_branch
      %19 = sbr.rel target = $region3
    $region8: #{tpu_custom_call.1} parent=1 // loop_exit
      _
    %1645 = vsyncpa [#allocation4], 1
    %s1646 = scalar_lea.sflag [#allocation4], 1
    %1647 = vsyncpa %s1646, 1
    %1648 = vsyncpa [#allocation7], 1
    %1649 = vsyncpa [#allocation5], 1
    %s1650 = scalar_lea.sflag [#allocation5], 1
    %1651 = vsyncpa %s1650, 1
    %1652 = vsyncpa [#allocation10], 1
    %s1653 = scalar_lea.sflag [#allocation10], 1
    %1654 = vsyncpa %s1653, 1

</llo_original>
